<compile_context>
chip_gen: v6e
topology: v6e:2x2x1
jax: 0.10.0
libtpu: 0.0.40
codegen_flags: <defaults>
</compile_context>

<pallas_src>
import math
from functools import partial

import jax
import jax.numpy as jnp
from jax.experimental import pallas as pl
from jax.experimental.pallas import tpu as pltpu

PI = math.pi
LOG2 = math.log(2.0)


# ---------------------------------------------------------------------------
# Deterministic filter construction (the module has no learned parameters).
# ---------------------------------------------------------------------------
def _low_filter(r):
    band = ((r > PI / 4) & (r < PI / 2)).astype(jnp.float32)
    return (r <= PI / 4).astype(jnp.float32) + band * jnp.cos(
        PI / 2 * (jnp.log(4.0 * r / PI) / LOG2)
    )


def _high_filter(r):
    band = ((r > PI / 4) & (r < PI / 2)).astype(jnp.float32)
    return (r >= PI / 2).astype(jnp.float32) + band * jnp.cos(
        PI / 2 * (jnp.log(2.0 * r / PI) / LOG2)
    )


def _steer_filter(t, k, n):
    alpha = 2 ** (n - 1) * math.factorial(n - 1) / (n * math.factorial(2 * (n - 1))) ** 0.5
    mask = (
        jnp.abs(jnp.remainder(t + PI - PI * k / n, 2 * PI) - PI) < PI / 2
    ).astype(jnp.float32)
    return (alpha * jnp.cos(t - PI * k / n) ** (n - 1) * mask).astype(jnp.float32)


def build_layer_band_filters(n_i, n_j, scale, n_ori, is_first):
    """Stacked real-valued sub-band filters for one pyramid layer.

    Shape: (n_bands, H_s, W_s) with n_bands = n_ori + 1 + is_first.
    Band order matches the PyTorch layer: [h0?] + oriented + [low].
    """
    n_i_ = n_i // 2 ** scale
    n_j_ = n_j // 2 ** scale
    l_y = jnp.linspace(-(n_i_ // 2), n_i_ // 2 - 1, n_i_, dtype=jnp.float32)
    l_x = jnp.linspace(-(n_j_ // 2), n_j_ // 2 - 1, n_j_, dtype=jnp.float32)
    x, y = jnp.meshgrid(l_x, l_y, indexing="xy")
    r = jnp.sqrt((x * 2 * PI / n_j_) ** 2 + (y * 2 * PI / n_i_) ** 2)
    th = jnp.arctan2(y, x)
    r = r.at[n_i_ // 2, n_j_ // 2].set(1e-15)

    filter_l = _low_filter(r)
    filter_h = _high_filter(r)
    filter_ori = [_steer_filter(th, k, n_ori) for k in range(n_ori)]

    if is_first:
        filter_l0 = _low_filter(r / 2)
        filter_h0 = _high_filter(r / 2)
        bands = [filter_h0]
        bands += [2.0 * filter_ori[k] * filter_h * filter_l0 for k in range(n_ori)]
        bands += [filter_l * filter_l0]
    else:
        bands = [2.0 * filter_ori[k] * filter_h for k in range(n_ori)]
        bands += [filter_l]
    return jnp.stack(bands, axis=0).astype(jnp.float32)


# ---------------------------------------------------------------------------
# Pallas kernel: all sub-bands of one (BC-tile, lane-tile) chunk in one shot.
# ---------------------------------------------------------------------------
def _band_mul_kernel(x_ref, f_ref, o_ref):
    # x_ref: (bc_t, 1, hw_t)   interleaved (re, im) spectrum rows
    # f_ref: (nb,  hw_t)       interleaved (value-duplicated) real band filters
    # o_ref: (bc_t, nb, hw_t)  all filtered bands, written densely at once
    x = x_ref[...]                       # (bc_t, 1, hw_t)
    f = f_ref[...]                       # (nb, hw_t)
    o_ref[...] = x * f[None, :, :]       # -> (bc_t, nb, hw_t), dense lane store


def _choose_tiles(bc, nb, hw2, budget_bytes=24 * 1024 * 1024):
    """Pick (bc_tile, hw_tile): lane-dense first, then as many rows as fit."""
    nb_pad = ((nb + 7) // 8) * 8  # sublane padding of the band dim in VMEM

    def vmem_bytes(bc_t, hw_t):
        # double-buffered f32 blocks: x (bc_t, 1->8, hw_t), f (nb_pad, hw_t),
        # out (bc_t, nb_pad, hw_t)
        return 2 * 4 * hw_t * (bc_t * 8 + nb_pad + bc_t * nb_pad)

    hw_cands = [hw2]
    h = hw2
    while h % 2 == 0 and (h // 2) >= 128 and (h // 2) % 128 == 0:
        h //= 2
        hw_cands.append(h)
    bc_cands = [d for d in range(bc, 0, -1) if bc % d == 0]

    for hw_t in hw_cands:          # widest (lane-dense) tiles first
        for bc_t in bc_cands:      # then the most batch*channel rows per step
            if vmem_bytes(bc_t, hw_t) <= budget_bytes:
                return bc_t, hw_t
    return 1, hw_cands[-1]


def apply_band_filters(spec, filters, use_pallas=True):
    """spec: complex64 (B, C, H, W); filters: float32 (nb, H, W).

    Returns complex64 (B, C, nb, H, W) = filters[None, None] * spec[:, :, None].
    """
    B, C, H, W = spec.shape
    nb = filters.shape[0]
    BC = B * C
    HW2 = H * W * 2

    if (not use_pallas) or HW2 < 128:
        # Tiny tiles (deepest scales): a fused XLA broadcast multiply beats any
        # kernel-launch / masked narrow-lane store overhead.
        return (spec[:, :, None, :, :] * filters[None, None, :, :, :]).astype(jnp.complex64)

    # Interleave complex64 as f32 (re, im) pairs and flatten the spatial dims so
    # the last (lane) dim is wide -> dense unmasked vector stores in the kernel.
    x_ri = jnp.stack([jnp.real(spec), jnp.imag(spec)], axis=-1)
    x_ri = x_ri.reshape(BC, 1, HW2).astype(jnp.float32)
    # Duplicate each filter value so it lines up with the (re, im) pairs.
    f_ri = jnp.repeat(filters.reshape(nb, H * W).astype(jnp.float32), 2, axis=-1)

    bc_t, hw_t = _choose_tiles(BC, nb, HW2)
    grid = (BC // bc_t, HW2 // hw_t)

    out = pl.pallas_call(
        _band_mul_kernel,
        out_shape=jax.ShapeDtypeStruct((BC, nb, HW2), jnp.float32),
        grid=grid,
        in_specs=[
            pl.BlockSpec((bc_t, 1, hw_t), lambda i, j: (i, 0, j)),
            pl.BlockSpec((nb, hw_t), lambda i, j: (0, j)),
        ],
        out_specs=pl.BlockSpec((bc_t, nb, hw_t), lambda i, j: (i, 0, j)),
        compiler_params=pltpu.CompilerParams(
            dimension_semantics=("parallel", "parallel"),
            vmem_limit_bytes=32 * 1024 * 1024,
        ),
    )(x_ri, f_ri)

    out = out.reshape(B, C, nb, H, W, 2)
    # TODO(synk): no pure f32->complex64 bitcast exposed in JAX; lax.complex is
    # the minimal recombine and fuses with the following ifftshift/ifft glue.
    return jax.lax.complex(out[..., 0], out[..., 1])


# ---------------------------------------------------------------------------
# SteerablePyramid.forward (real=False, up_sampled=False, fourier=False)
# ---------------------------------------------------------------------------
def steerable_pyramid_forward(x, n_scale, n_ori, band_filters, use_pallas=True):
    """x: float32 (B, C, H, W). Returns (outputs, lows) — lists of complex64
    arrays mirroring the PyTorch module's `self.output` list / `self.low`."""
    # TODO(synk): fft2/ifft2/fftshift have no Pallas primitive; plain-JAX glue.
    spec = jnp.fft.fftshift(jnp.fft.fft2(x), axes=(-2, -1)).astype(jnp.complex64)

    outputs = []
    lows = []
    for k in range(n_scale):
        bands_f = apply_band_filters(spec, band_filters[k], use_pallas=use_pallas)
        spatial = jnp.fft.ifft2(jnp.fft.ifftshift(bands_f, axes=(-2, -1))).astype(jnp.complex64)

        if k == 0:
            outputs.append(spatial[:, :, :1])
            outputs.append(spatial[:, :, 1:-1])
            if n_scale == 1:
                outputs.append(spatial[:, :, -1:])
        elif k == n_scale - 1:
            outputs.append(spatial[:, :, :-1])
            outputs.append(spatial[:, :, -1:])
        else:
            outputs.append(spatial[:, :, :-1])
        lows.append(spatial[:, :, -1:])

        if k < n_scale - 1:
            # Frequency-domain downsample: centered crop of the low-pass band
            # (equivalent to the module's advanced-index crop).
            # TODO(synk): could be emitted directly (cropped) by the kernel as a
            # small extra output to avoid re-reading the low band from HBM.
            low_f = bands_f[:, :, -1]
            Hk, Wk = low_f.shape[-2:]
            Hn, Wn = Hk // 2, Wk // 2
            i0 = Hk // 2 - Hn // 2
            j0 = Wk // 2 - Wn // 2
            spec = low_f[:, :, i0:i0 + Hn, j0:j0 + Wn]
    return outputs, lows


if __name__ == "__main__":
    B, C, H, W = 2, 4, 16, 16
    n_scale, n_ori = 3, 4

    key = jax.random.PRNGKey(0)
    x = jax.random.normal(key, (B, C, H, W), dtype=jnp.float32)

    band_filters = [
        build_layer_band_filters(H, W, s, n_ori, is_first=(s == 0))
        for s in range(n_scale)
    ]

    # Jit the whole pyramid so FFT / shift / crop glue fuses around the kernel.
    forward_pallas = jax.jit(
        partial(steerable_pyramid_forward, use_pallas=True),
        static_argnums=(1, 2),
    )
    outputs, lows = forward_pallas(x, n_scale, n_ori, band_filters)
    outputs = [jax.block_until_ready(o) for o in outputs]
    lows = [jax.block_until_ready(o) for o in lows]

    # --- Correctness checks -------------------------------------------------
    # 1) Pallas band multiply vs. plain-JAX broadcast at scale 0.
    spec0 = jnp.fft.fftshift(jnp.fft.fft2(x), axes=(-2, -1)).astype(jnp.complex64)
    ref0 = spec0[:, :, None, :, :] * band_filters[0][None, None, :, :, :]
    got0 = apply_band_filters(spec0, band_filters[0], use_pallas=True)
    got0 = jax.block_until_ready(got0)
    assert got0.shape == (B, C, n_ori + 2, H, W)
    assert jnp.allclose(ref0, got0, atol=1e-4, rtol=1e-4)

    # 2) End-to-end pyramid vs. a pure-JAX (no-Pallas) reference.
    ref_outputs, ref_lows = steerable_pyramid_forward(
        x, n_scale, n_ori, band_filters, use_pallas=False)
    for got, ref in zip(outputs, ref_outputs):
        assert got.shape == ref.shape
        assert jnp.allclose(got, ref, atol=1e-4, rtol=1e-4)
    for got, ref in zip(lows, ref_lows):
        assert jnp.allclose(got, ref, atol=1e-4, rtol=1e-4)

    # 3) Expected pyramid shapes/dtypes (up_sampled=False).
    assert outputs[0].shape == (B, C, 1, H, W)
    assert outputs[1].shape == (B, C, n_ori, H, W)
    assert outputs[2].shape == (B, C, n_ori, H // 2, W // 2)
    assert outputs[3].shape == (B, C, n_ori, H // 4, W // 4)
    assert outputs[4].shape == (B, C, 1, H // 4, W // 4)
    assert all(o.dtype == jnp.complex64 for o in outputs)

    print("KERNEL_OK")
</pallas_src>

<mosaic_0001>
module attributes {stable_mosaic.version = 11 : i64} {
  func.func @_band_mul_kernel(%arg0: i32, %arg1: i32, %arg2: memref<8x1x512xf32, #tpu.memory_space<vmem>>, %arg3: memref<6x512xf32, #tpu.memory_space<vmem>>, %arg4: memref<8x6x512xf32, #tpu.memory_space<vmem>>) attributes {dimension_semantics = [#tpu.dimension_semantics<parallel>, #tpu.dimension_semantics<parallel>], iteration_bounds = array<i64: 1, 1>, scalar_prefetch = 0 : i64, scratch_operands = 0 : i64, tpu.core_type = #tpu.core_type<tc>, window_params = [{transform_indices = @transform_0, window_bounds = array<i64: 8, 1, 512>}, {transform_indices = @transform_1, window_bounds = array<i64: 6, 512>}, {transform_indices = @transform_2, window_bounds = array<i64: 8, 6, 512>}]} {
    %c0 = arith.constant 0 : index
    %c0_0 = arith.constant 0 : index
    %c0_1 = arith.constant 0 : index
    %0 = vector.load %arg2[%c0, %c0_0, %c0_1] : memref<8x1x512xf32, #tpu.memory_space<vmem>>, vector<8x1x512xf32>
    %c0_2 = arith.constant 0 : index
    %c0_3 = arith.constant 0 : index
    %1 = vector.load %arg3[%c0_2, %c0_3] : memref<6x512xf32, #tpu.memory_space<vmem>>, vector<6x512xf32>
    %2 = vector.shape_cast %1 : vector<6x512xf32> to vector<1x6x512xf32>
    %3 = vector.broadcast %0 : vector<8x1x512xf32> to vector<8x6x512xf32>
    %4 = vector.broadcast %2 : vector<1x6x512xf32> to vector<8x6x512xf32>
    %5 = arith.mulf %3, %4 : vector<8x6x512xf32>
    %c0_4 = arith.constant 0 : index
    %c0_5 = arith.constant 0 : index
    %c0_6 = arith.constant 0 : index
    %6 = vector.load %arg4[%c0_4, %c0_5, %c0_6] : memref<8x6x512xf32, #tpu.memory_space<vmem>>, vector<8x6x512xf32>
    tpu.vector_store %arg4[%c0_4, %c0_5, %c0_6], %5 {strides = array<i32>} : memref<8x6x512xf32, #tpu.memory_space<vmem>>, vector<8x6x512xf32>,
    return
  }
  func.func @transform_0(%arg0: i32, %arg1: i32) -> (i32, i32, i32) {
    %c0_i32 = arith.constant 0 : i32
    %c0_i32_0 = arith.constant 0 : i32
    return %arg0, %c0_i32, %arg1 : i32, i32, i32
  }
  func.func @transform_1(%arg0: i32, %arg1: i32) -> (i32, i32) {
    %c0_i32 = arith.constant 0 : i32
    %c0_i32_0 = arith.constant 0 : i32
    return %c0_i32, %arg1 : i32, i32
  }
  func.func @transform_2(%arg0: i32, %arg1: i32) -> (i32, i32, i32) {
    %c0_i32 = arith.constant 0 : i32
    %c0_i32_0 = arith.constant 0 : i32
    return %arg0, %c0_i32, %arg1 : i32, i32, i32
  }
}

module attributes {stable_mosaic.version = 11 : i64} {
  func.func @_band_mul_kernel(%arg0: i32, %arg1: i32, %arg2: memref<8x1x128xf32, #tpu.memory_space<vmem>>, %arg3: memref<5x128xf32, #tpu.memory_space<vmem>>, %arg4: memref<8x5x128xf32, #tpu.memory_space<vmem>>) attributes {dimension_semantics = [#tpu.dimension_semantics<parallel>, #tpu.dimension_semantics<parallel>], iteration_bounds = array<i64: 1, 1>, scalar_prefetch = 0 : i64, scratch_operands = 0 : i64, tpu.core_type = #tpu.core_type<tc>, window_params = [{transform_indices = @transform_0, window_bounds = array<i64: 8, 1, 128>}, {transform_indices = @transform_1, window_bounds = array<i64: 5, 128>}, {transform_indices = @transform_2, window_bounds = array<i64: 8, 5, 128>}]} {
    %c0 = arith.constant 0 : index
    %c0_0 = arith.constant 0 : index
    %c0_1 = arith.constant 0 : index
    %0 = vector.load %arg2[%c0, %c0_0, %c0_1] : memref<8x1x128xf32, #tpu.memory_space<vmem>>, vector<8x1x128xf32>
    %c0_2 = arith.constant 0 : index
    %c0_3 = arith.constant 0 : index
    %1 = vector.load %arg3[%c0_2, %c0_3] : memref<5x128xf32, #tpu.memory_space<vmem>>, vector<5x128xf32>
    %2 = vector.shape_cast %1 : vector<5x128xf32> to vector<1x5x128xf32>
    %3 = vector.broadcast %0 : vector<8x1x128xf32> to vector<8x5x128xf32>
    %4 = vector.broadcast %2 : vector<1x5x128xf32> to vector<8x5x128xf32>
    %5 = arith.mulf %3, %4 : vector<8x5x128xf32>
    %c0_4 = arith.constant 0 : index
    %c0_5 = arith.constant 0 : index
    %c0_6 = arith.constant 0 : index
    %6 = vector.load %arg4[%c0_4, %c0_5, %c0_6] : memref<8x5x128xf32, #tpu.memory_space<vmem>>, vector<8x5x128xf32>
    tpu.vector_store %arg4[%c0_4, %c0_5, %c0_6], %5 {strides = array<i32>} : memref<8x5x128xf32, #tpu.memory_space<vmem>>, vector<8x5x128xf32>,
    return
  }
  func.func @transform_0(%arg0: i32, %arg1: i32) -> (i32, i32, i32) {
    %c0_i32 = arith.constant 0 : i32
    %c0_i32_0 = arith.constant 0 : i32
    return %arg0, %c0_i32, %arg1 : i32, i32, i32
  }
  func.func @transform_1(%arg0: i32, %arg1: i32) -> (i32, i32) {
    %c0_i32 = arith.constant 0 : i32
    %c0_i32_0 = arith.constant 0 : i32
    return %c0_i32, %arg1 : i32, i32
  }
  func.func @transform_2(%arg0: i32, %arg1: i32) -> (i32, i32, i32) {
    %c0_i32 = arith.constant 0 : i32
    %c0_i32_0 = arith.constant 0 : i32
    return %arg0, %c0_i32, %arg1 : i32, i32, i32
  }
}

</mosaic_0001>

<llo_original>
// kernel: steerable_pyramid_forward.2
$region0: #{steerable_pyramid_forward.2}
  #allocation0 [shape = 'u32[]', space=smem, size = 0x4, offset = 0x4, fixed_abs, tag = 'smem constant byte address 0x4 - core index']
  #allocation1 [shape = 'u32[144,128]{1,0:T(1,128)}', space=vmem, size = 0x12000, scoped, tag = 'internal scratch']
  %s0 = inlined_call_operand.vmem [shape: f32[8,1,512], index: 0, kind: input, shape index: {}]
  %s1 = inlined_call_operand.vmem [shape: f32[6,512], index: 1, kind: input, shape index: {}]
  %s2 = inlined_call_operand.vmem [shape: f32[8,6,512], index: 2, kind: output, shape index: {}]
  %s3 = sld [smem:[#allocation0]]
  $region18: #{steerable_pyramid_forward.2} parent=0
    _
  %s5 = ssub.s32 1, %s3
  %s6 = scalar_select 0, %s5, %s3
  // Predicated region
  $region2: #{steerable_pyramid_forward.2} parent=0 // pred_check
    _
  $region3: #{steerable_pyramid_forward.2} parent=0 // pred_check_branch
    %8 = sbr.rel (0) target = $region5
  $region4: #{steerable_pyramid_forward.2} parent=0 // pred_region
    _
  $region5: #{steerable_pyramid_forward.2} parent=0 // pred_fallthru
    _
  // Predicated region
  $region6: #{steerable_pyramid_forward.2} parent=0 // pred_check
    _
  $region7: #{steerable_pyramid_forward.2} parent=0 // pred_check_branch
    %10 = sbr.rel (0) target = $region9
  $region8: #{steerable_pyramid_forward.2} parent=0 // pred_region
    _
  $region9: #{steerable_pyramid_forward.2} parent=0 // pred_fallthru
    _
  %v11 = vld [vmem:[%s0] sm:$0xf]
  %v12 = vld [vmem:[%s0 + $0x4] sm:$0xf]
  %v13 = vld [vmem:[%s0 + $0x8] sm:$0xf]
  %v14 = vld [vmem:[%s0 + $0xc] sm:$0xf]
  %v15 = vld [vmem:[%s0 + $0x10] sm:$0xf]
  %v16 = vld [vmem:[%s0 + $0x14] sm:$0xf]
  %v17 = vld [vmem:[%s0 + $0x18] sm:$0xf]
  %v18 = vld [vmem:[%s0 + $0x1c] sm:$0xf]
  %v19 = vld [vmem:[%s1] sm:$0x3f]
  %v20 = vld [vmem:[%s1 + $0x8] sm:$0x3f]
  %v21 = vld [vmem:[%s1 + $0x10] sm:$0x3f]
  %v22 = vld [vmem:[%s1 + $0x18] sm:$0x3f]
  %v31 = vlaneseq
  %v32 = vshrl.u32 %v31, 7
  %v33 = vsub.s32 0, %v32
  %v34 = vrot.slane %v11, %v33
  %v35 = vlaneseq
  %v36 = vshrl.u32 %v35, 7
  %v37 = vsub.s32 1, %v36
  %v38 = vrot.slane %v11, %v37
  %v39 = vlaneseq
  %v40 = vshrl.u32 %v39, 7
  %v41 = vsub.s32 2, %v40
  %v42 = vrot.slane %v11, %v41
  %v43 = vlaneseq
  %v44 = vshrl.u32 %v43, 7
  %v45 = vsub.s32 3, %v44
  %v46 = vrot.slane %v11, %v45
  %v47 = vlaneseq
  %v48 = vshrl.u32 %v47, 7
  %v49 = vsub.s32 0, %v48
  %v50 = vrot.slane %v12, %v49
  %v51 = vlaneseq
  %v52 = vshrl.u32 %v51, 7
  %v53 = vsub.s32 1, %v52
  %v54 = vrot.slane %v12, %v53
  %v55 = vlaneseq
  %v56 = vshrl.u32 %v55, 7
  %v57 = vsub.s32 2, %v56
  %v58 = vrot.slane %v12, %v57
  %v59 = vlaneseq
  %v60 = vshrl.u32 %v59, 7
  %v61 = vsub.s32 3, %v60
  %v62 = vrot.slane %v12, %v61
  %v63 = vlaneseq
  %v64 = vshrl.u32 %v63, 7
  %v65 = vsub.s32 0, %v64
  %v66 = vrot.slane %v13, %v65
  %v67 = vlaneseq
  %v68 = vshrl.u32 %v67, 7
  %v69 = vsub.s32 1, %v68
  %v70 = vrot.slane %v13, %v69
  %v71 = vlaneseq
  %v72 = vshrl.u32 %v71, 7
  %v73 = vsub.s32 2, %v72
  %v74 = vrot.slane %v13, %v73
  %v75 = vlaneseq
  %v76 = vshrl.u32 %v75, 7
  %v77 = vsub.s32 3, %v76
  %v78 = vrot.slane %v13, %v77
  %v79 = vlaneseq
  %v80 = vshrl.u32 %v79, 7
  %v81 = vsub.s32 0, %v80
  %v82 = vrot.slane %v14, %v81
  %v83 = vlaneseq
  %v84 = vshrl.u32 %v83, 7
  %v85 = vsub.s32 1, %v84
  %v86 = vrot.slane %v14, %v85
  %v87 = vlaneseq
  %v88 = vshrl.u32 %v87, 7
  %v89 = vsub.s32 2, %v88
  %v90 = vrot.slane %v14, %v89
  %v91 = vlaneseq
  %v92 = vshrl.u32 %v91, 7
  %v93 = vsub.s32 3, %v92
  %v94 = vrot.slane %v14, %v93
  %v95 = vlaneseq
  %v96 = vshrl.u32 %v95, 7
  %v97 = vsub.s32 0, %v96
  %v98 = vrot.slane %v15, %v97
  %v99 = vlaneseq
  %v100 = vshrl.u32 %v99, 7
  %v101 = vsub.s32 1, %v100
  %v102 = vrot.slane %v15, %v101
  %v103 = vlaneseq
  %v104 = vshrl.u32 %v103, 7
  %v105 = vsub.s32 2, %v104
  %v106 = vrot.slane %v15, %v105
  %v107 = vlaneseq
  %v108 = vshrl.u32 %v107, 7
  %v109 = vsub.s32 3, %v108
  %v110 = vrot.slane %v15, %v109
  %v111 = vlaneseq
  %v112 = vshrl.u32 %v111, 7
  %v113 = vsub.s32 0, %v112
  %v114 = vrot.slane %v16, %v113
  %v115 = vlaneseq
  %v116 = vshrl.u32 %v115, 7
  %v117 = vsub.s32 1, %v116
  %v118 = vrot.slane %v16, %v117
  %v119 = vlaneseq
  %v120 = vshrl.u32 %v119, 7
  %v121 = vsub.s32 2, %v120
  %v122 = vrot.slane %v16, %v121
  %v123 = vlaneseq
  %v124 = vshrl.u32 %v123, 7
  %v125 = vsub.s32 3, %v124
  %v126 = vrot.slane %v16, %v125
  %v127 = vlaneseq
  %v128 = vshrl.u32 %v127, 7
  %v129 = vsub.s32 0, %v128
  %v130 = vrot.slane %v17, %v129
  %v131 = vlaneseq
  %v132 = vshrl.u32 %v131, 7
  %v133 = vsub.s32 1, %v132
  %v134 = vrot.slane %v17, %v133
  %v135 = vlaneseq
  %v136 = vshrl.u32 %v135, 7
  %v137 = vsub.s32 2, %v136
  %v138 = vrot.slane %v17, %v137
  %v139 = vlaneseq
  %v140 = vshrl.u32 %v139, 7
  %v141 = vsub.s32 3, %v140
  %v142 = vrot.slane %v17, %v141
  %v143 = vlaneseq
  %v144 = vshrl.u32 %v143, 7
  %v145 = vsub.s32 0, %v144
  %v146 = vrot.slane %v18, %v145
  %v147 = vlaneseq
  %v148 = vshrl.u32 %v147, 7
  %v149 = vsub.s32 1, %v148
  %v150 = vrot.slane %v18, %v149
  %v151 = vlaneseq
  %v152 = vshrl.u32 %v151, 7
  %v153 = vsub.s32 2, %v152
  %v154 = vrot.slane %v18, %v153
  %v155 = vlaneseq
  %v156 = vshrl.u32 %v155, 7
  %v157 = vsub.s32 3, %v156
  %v158 = vrot.slane %v18, %v157
  %v191 = vmul.f32 %v34, %v19
  %v192 = vmul.f32 %v38, %v20
  %v193 = vmul.f32 %v42, %v21
  %v194 = vmul.f32 %v46, %v22
  %v195 = vmul.f32 %v50, %v19
  %v196 = vmul.f32 %v54, %v20
  %v197 = vmul.f32 %v58, %v21
  %v198 = vmul.f32 %v62, %v22
  %v199 = vmul.f32 %v66, %v19
  %v200 = vmul.f32 %v70, %v20
  %v201 = vmul.f32 %v74, %v21
  %v202 = vmul.f32 %v78, %v22
  %v203 = vmul.f32 %v82, %v19
  %v204 = vmul.f32 %v86, %v20
  %v205 = vmul.f32 %v90, %v21
  %v206 = vmul.f32 %v94, %v22
  %v207 = vmul.f32 %v98, %v19
  %v208 = vmul.f32 %v102, %v20
  %v209 = vmul.f32 %v106, %v21
  %v210 = vmul.f32 %v110, %v22
  %v211 = vmul.f32 %v114, %v19
  %v212 = vmul.f32 %v118, %v20
  %v213 = vmul.f32 %v122, %v21
  %v214 = vmul.f32 %v126, %v22
  %v215 = vmul.f32 %v130, %v19
  %v216 = vmul.f32 %v134, %v20
  %v217 = vmul.f32 %v138, %v21
  %v218 = vmul.f32 %v142, %v22
  %v219 = vmul.f32 %v146, %v19
  %v220 = vmul.f32 %v150, %v20
  %v221 = vmul.f32 %v154, %v21
  %v222 = vmul.f32 %v158, %v22
  %223 = vst [vmem:[%s2] sm:$0x3f] %v191
  %224 = vst [vmem:[%s2 + $0x8] sm:$0x3f] %v192
  %225 = vst [vmem:[%s2 + $0x10] sm:$0x3f] %v193
  %226 = vst [vmem:[%s2 + $0x18] sm:$0x3f] %v194
  %227 = vst [vmem:[%s2 + $0x20] sm:$0x3f] %v195
  %228 = vst [vmem:[%s2 + $0x28] sm:$0x3f] %v196
  %229 = vst [vmem:[%s2 + $0x30] sm:$0x3f] %v197
  %230 = vst [vmem:[%s2 + $0x38] sm:$0x3f] %v198
  %231 = vst [vmem:[%s2 + $0x40] sm:$0x3f] %v199
  %232 = vst [vmem:[%s2 + $0x48] sm:$0x3f] %v200
  %233 = vst [vmem:[%s2 + $0x50] sm:$0x3f] %v201
  %234 = vst [vmem:[%s2 + $0x58] sm:$0x3f] %v202
  %235 = vst [vmem:[%s2 + $0x60] sm:$0x3f] %v203
  %236 = vst [vmem:[%s2 + $0x68] sm:$0x3f] %v204
  %237 = vst [vmem:[%s2 + $0x70] sm:$0x3f] %v205
  %238 = vst [vmem:[%s2 + $0x78] sm:$0x3f] %v206
  %239 = vst [vmem:[%s2 + $0x80] sm:$0x3f] %v207
  %240 = vst [vmem:[%s2 + $0x88] sm:$0x3f] %v208
  %241 = vst [vmem:[%s2 + $0x90] sm:$0x3f] %v209
  %242 = vst [vmem:[%s2 + $0x98] sm:$0x3f] %v210
  %243 = vst [vmem:[%s2 + $0xa0] sm:$0x3f] %v211
  %244 = vst [vmem:[%s2 + $0xa8] sm:$0x3f] %v212
  %245 = vst [vmem:[%s2 + $0xb0] sm:$0x3f] %v213
  %246 = vst [vmem:[%s2 + $0xb8] sm:$0x3f] %v214
  %247 = vst [vmem:[%s2 + $0xc0] sm:$0x3f] %v215
  %248 = vst [vmem:[%s2 + $0xc8] sm:$0x3f] %v216
  %249 = vst [vmem:[%s2 + $0xd0] sm:$0x3f] %v217
  %250 = vst [vmem:[%s2 + $0xd8] sm:$0x3f] %v218
  %251 = vst [vmem:[%s2 + $0xe0] sm:$0x3f] %v219
  %252 = vst [vmem:[%s2 + $0xe8] sm:$0x3f] %v220
  %253 = vst [vmem:[%s2 + $0xf0] sm:$0x3f] %v221
  %254 = vst [vmem:[%s2 + $0xf8] sm:$0x3f] %v222
  // Predicated region
  $region10: #{steerable_pyramid_forward.2} parent=0 // pred_check
    _
  $region11: #{steerable_pyramid_forward.2} parent=0 // pred_check_branch
    %256 = sbr.rel (0) target = $region13
  $region12: #{steerable_pyramid_forward.2} parent=0 // pred_region
    _
  $region13: #{steerable_pyramid_forward.2} parent=0 // pred_fallthru
    _
  // Predicated region
  $region14: #{steerable_pyramid_forward.2} parent=0 // pred_check
    _
  $region15: #{steerable_pyramid_forward.2} parent=0 // pred_check_branch
    %258 = sbr.rel (0) target = $region17
  $region16: #{steerable_pyramid_forward.2} parent=0 // pred_region
    _
  $region17: #{steerable_pyramid_forward.2} parent=0 // pred_fallthru
    _

// kernel: steerable_pyramid_forward.3
$region0: #{steerable_pyramid_forward.3}
  #allocation0 [shape = 'u32[]', space=smem, size = 0x4, offset = 0x4, fixed_abs, tag = 'smem constant byte address 0x4 - core index']
  #allocation1 [shape = 'u32[144,128]{1,0:T(1,128)}', space=vmem, size = 0x12000, scoped, tag = 'internal scratch']
  %s0 = inlined_call_operand.vmem [shape: f32[8,1,128], index: 0, kind: input, shape index: {}]
  %s1 = inlined_call_operand.vmem [shape: f32[5,128], index: 1, kind: input, shape index: {}]
  %s2 = inlined_call_operand.vmem [shape: f32[8,5,128], index: 2, kind: output, shape index: {}]
  %s3 = sld [smem:[#allocation0]]
  $region18: #{steerable_pyramid_forward.3} parent=0
    _
  %s5 = ssub.s32 1, %s3
  %s6 = scalar_select 0, %s5, %s3
  // Predicated region
  $region2: #{steerable_pyramid_forward.3} parent=0 // pred_check
    _
  $region3: #{steerable_pyramid_forward.3} parent=0 // pred_check_branch
    %8 = sbr.rel (0) target = $region5
  $region4: #{steerable_pyramid_forward.3} parent=0 // pred_region
    _
  $region5: #{steerable_pyramid_forward.3} parent=0 // pred_fallthru
    _
  // Predicated region
  $region6: #{steerable_pyramid_forward.3} parent=0 // pred_check
    _
  $region7: #{steerable_pyramid_forward.3} parent=0 // pred_check_branch
    %10 = sbr.rel (0) target = $region9
  $region8: #{steerable_pyramid_forward.3} parent=0 // pred_region
    _
  $region9: #{steerable_pyramid_forward.3} parent=0 // pred_fallthru
    _
  %v11 = vld [vmem:[%s0] sm:$0x1]
  %v12 = vld [vmem:[%s0 + $0x1] sm:$0x1]
  %v13 = vld [vmem:[%s0 + $0x2] sm:$0x1]
  %v14 = vld [vmem:[%s0 + $0x3] sm:$0x1]
  %v15 = vld [vmem:[%s0 + $0x4] sm:$0x1]
  %v16 = vld [vmem:[%s0 + $0x5] sm:$0x1]
  %v17 = vld [vmem:[%s0 + $0x6] sm:$0x1]
  %v18 = vld [vmem:[%s0 + $0x7] sm:$0x1]
  %v19 = vld [vmem:[%s1] sm:$0x1f]
  %v28 = vlaneseq
  %v29 = vshrl.u32 %v28, 7
  %v30 = vsub.s32 0, %v29
  %v31 = vrot.slane %v11, %v30
  %v32 = vlaneseq
  %v33 = vshrl.u32 %v32, 7
  %v34 = vsub.s32 0, %v33
  %v35 = vrot.slane %v12, %v34
  %v36 = vlaneseq
  %v37 = vshrl.u32 %v36, 7
  %v38 = vsub.s32 0, %v37
  %v39 = vrot.slane %v13, %v38
  %v40 = vlaneseq
  %v41 = vshrl.u32 %v40, 7
  %v42 = vsub.s32 0, %v41
  %v43 = vrot.slane %v14, %v42
  %v44 = vlaneseq
  %v45 = vshrl.u32 %v44, 7
  %v46 = vsub.s32 0, %v45
  %v47 = vrot.slane %v15, %v46
  %v48 = vlaneseq
  %v49 = vshrl.u32 %v48, 7
  %v50 = vsub.s32 0, %v49
  %v51 = vrot.slane %v16, %v50
  %v52 = vlaneseq
  %v53 = vshrl.u32 %v52, 7
  %v54 = vsub.s32 0, %v53
  %v55 = vrot.slane %v17, %v54
  %v56 = vlaneseq
  %v57 = vshrl.u32 %v56, 7
  %v58 = vsub.s32 0, %v57
  %v59 = vrot.slane %v18, %v58
  %v68 = vmul.f32 %v31, %v19
  %v69 = vmul.f32 %v35, %v19
  %v70 = vmul.f32 %v39, %v19
  %v71 = vmul.f32 %v43, %v19
  %v72 = vmul.f32 %v47, %v19
  %v73 = vmul.f32 %v51, %v19
  %v74 = vmul.f32 %v55, %v19
  %v75 = vmul.f32 %v59, %v19
  %76 = vst [vmem:[%s2] sm:$0x1f] %v68
  %77 = vst [vmem:[%s2 + $0x8] sm:$0x1f] %v69
  %78 = vst [vmem:[%s2 + $0x10] sm:$0x1f] %v70
  %79 = vst [vmem:[%s2 + $0x18] sm:$0x1f] %v71
  %80 = vst [vmem:[%s2 + $0x20] sm:$0x1f] %v72
  %81 = vst [vmem:[%s2 + $0x28] sm:$0x1f] %v73
  %82 = vst [vmem:[%s2 + $0x30] sm:$0x1f] %v74
  %83 = vst [vmem:[%s2 + $0x38] sm:$0x1f] %v75
  // Predicated region
  $region10: #{steerable_pyramid_forward.3} parent=0 // pred_check
    _
  $region11: #{steerable_pyramid_forward.3} parent=0 // pred_check_branch
    %85 = sbr.rel (0) target = $region13
  $region12: #{steerable_pyramid_forward.3} parent=0 // pred_region
    _
  $region13: #{steerable_pyramid_forward.3} parent=0 // pred_fallthru
    _
  // Predicated region
  $region14: #{steerable_pyramid_forward.3} parent=0 // pred_check
    _
  $region15: #{steerable_pyramid_forward.3} parent=0 // pred_check_branch
    %87 = sbr.rel (0) target = $region17
  $region16: #{steerable_pyramid_forward.3} parent=0 // pred_region
    _
  $region17: #{steerable_pyramid_forward.3} parent=0 // pred_fallthru
    _

// kernel: custom-call.6
$region0: #{custom-call.6}
  %s0 = inlined_call_operand.vmem [shape: f32[2,4,1,8,8], index: 0, kind: input, shape index: {}]
  %s1 = inlined_call_operand.vmem [shape: f32[2,4,1,8,8], index: 1, kind: input, shape index: {}]
  %s2 = inlined_call_operand.vmem [shape: c64[2,4,1,8,8], index: 2, kind: output, shape index: {}]
  %s4 = scalar_lea.vmem %s2, 64
  %v5 = vld [vmem:[%s0] sm:$0xff]
  %6 = vst [vmem:[%s2] sm:$0xff] %v5
  %s7 = scalar_lea.vmem %s2, 8
  %s8 = scalar_lea.vmem %s0, 8
  %v9 = vld [vmem:[%s8] sm:$0xff]
  %10 = vst [vmem:[%s7] sm:$0xff] %v9
  %s11 = scalar_lea.vmem %s2, 16
  %s12 = scalar_lea.vmem %s0, 16
  %v13 = vld [vmem:[%s12] sm:$0xff]
  %14 = vst [vmem:[%s11] sm:$0xff] %v13
  %s15 = scalar_lea.vmem %s2, 24
  %s16 = scalar_lea.vmem %s0, 24
  %v17 = vld [vmem:[%s16] sm:$0xff]
  %18 = vst [vmem:[%s15] sm:$0xff] %v17
  %s19 = scalar_lea.vmem %s2, 32
  %s20 = scalar_lea.vmem %s0, 32
  %v21 = vld [vmem:[%s20] sm:$0xff]
  %22 = vst [vmem:[%s19] sm:$0xff] %v21
  %s23 = scalar_lea.vmem %s2, 40
  %s24 = scalar_lea.vmem %s0, 40
  %v25 = vld [vmem:[%s24] sm:$0xff]
  %26 = vst [vmem:[%s23] sm:$0xff] %v25
  %s27 = scalar_lea.vmem %s2, 48
  %s28 = scalar_lea.vmem %s0, 48
  %v29 = vld [vmem:[%s28] sm:$0xff]
  %30 = vst [vmem:[%s27] sm:$0xff] %v29
  %s31 = scalar_lea.vmem %s2, 56
  %s32 = scalar_lea.vmem %s0, 56
  %v33 = vld [vmem:[%s32] sm:$0xff]
  %34 = vst [vmem:[%s31] sm:$0xff] %v33
  %v35 = vld [vmem:[%s1] sm:$0xff]
  %36 = vst [vmem:[%s4] sm:$0xff] %v35
  %s37 = scalar_lea.vmem %s4, 8
  %s38 = scalar_lea.vmem %s1, 8
  %v39 = vld [vmem:[%s38] sm:$0xff]
  %40 = vst [vmem:[%s37] sm:$0xff] %v39
  %s41 = scalar_lea.vmem %s4, 16
  %s42 = scalar_lea.vmem %s1, 16
  %v43 = vld [vmem:[%s42] sm:$0xff]
  %44 = vst [vmem:[%s41] sm:$0xff] %v43
  %s45 = scalar_lea.vmem %s4, 24
  %s46 = scalar_lea.vmem %s1, 24
  %v47 = vld [vmem:[%s46] sm:$0xff]
  %48 = vst [vmem:[%s45] sm:$0xff] %v47
  %s49 = scalar_lea.vmem %s4, 32
  %s50 = scalar_lea.vmem %s1, 32
  %v51 = vld [vmem:[%s50] sm:$0xff]
  %52 = vst [vmem:[%s49] sm:$0xff] %v51
  %s53 = scalar_lea.vmem %s4, 40
  %s54 = scalar_lea.vmem %s1, 40
  %v55 = vld [vmem:[%s54] sm:$0xff]
  %56 = vst [vmem:[%s53] sm:$0xff] %v55
  %s57 = scalar_lea.vmem %s4, 48
  %s58 = scalar_lea.vmem %s1, 48
  %v59 = vld [vmem:[%s58] sm:$0xff]
  %60 = vst [vmem:[%s57] sm:$0xff] %v59
  %s61 = scalar_lea.vmem %s4, 56
  %s62 = scalar_lea.vmem %s1, 56
  %v63 = vld [vmem:[%s62] sm:$0xff]
  %64 = vst [vmem:[%s61] sm:$0xff] %v63

// kernel: custom-call.5
$region0: #{custom-call.5}
  %s0 = inlined_call_operand.vmem [shape: f32[2,4,1,16,16], index: 0, kind: input, shape index: {}]
  %s1 = inlined_call_operand.vmem [shape: f32[2,4,1,16,16], index: 1, kind: input, shape index: {}]
  %s2 = inlined_call_operand.vmem [shape: c64[2,4,1,16,16], index: 2, kind: output, shape index: {}]
  %s4 = scalar_lea.vmem %s2, 128
  %v5 = vld [vmem:[%s0] sm:$0xff]
  %6 = vst [vmem:[%s2] sm:$0xff] %v5
  %s7 = scalar_lea.vmem %s2, 8
  %s8 = scalar_lea.vmem %s0, 8
  %v9 = vld [vmem:[%s8] sm:$0xff]
  %10 = vst [vmem:[%s7] sm:$0xff] %v9
  %s11 = scalar_lea.vmem %s2, 16
  %s12 = scalar_lea.vmem %s0, 16
  %v13 = vld [vmem:[%s12] sm:$0xff]
  %14 = vst [vmem:[%s11] sm:$0xff] %v13
  %s15 = scalar_lea.vmem %s2, 24
  %s16 = scalar_lea.vmem %s0, 24
  %v17 = vld [vmem:[%s16] sm:$0xff]
  %18 = vst [vmem:[%s15] sm:$0xff] %v17
  %s19 = scalar_lea.vmem %s2, 32
  %s20 = scalar_lea.vmem %s0, 32
  %v21 = vld [vmem:[%s20] sm:$0xff]
  %22 = vst [vmem:[%s19] sm:$0xff] %v21
  %s23 = scalar_lea.vmem %s2, 40
  %s24 = scalar_lea.vmem %s0, 40
  %v25 = vld [vmem:[%s24] sm:$0xff]
  %26 = vst [vmem:[%s23] sm:$0xff] %v25
  %s27 = scalar_lea.vmem %s2, 48
  %s28 = scalar_lea.vmem %s0, 48
  %v29 = vld [vmem:[%s28] sm:$0xff]
  %30 = vst [vmem:[%s27] sm:$0xff] %v29
  %s31 = scalar_lea.vmem %s2, 56
  %s32 = scalar_lea.vmem %s0, 56
  %v33 = vld [vmem:[%s32] sm:$0xff]
  %34 = vst [vmem:[%s31] sm:$0xff] %v33
  %s35 = scalar_lea.vmem %s2, 64
  %s36 = scalar_lea.vmem %s0, 64
  %v37 = vld [vmem:[%s36] sm:$0xff]
  %38 = vst [vmem:[%s35] sm:$0xff] %v37
  %s39 = scalar_lea.vmem %s2, 72
  %s40 = scalar_lea.vmem %s0, 72
  %v41 = vld [vmem:[%s40] sm:$0xff]
  %42 = vst [vmem:[%s39] sm:$0xff] %v41
  %s43 = scalar_lea.vmem %s2, 80
  %s44 = scalar_lea.vmem %s0, 80
  %v45 = vld [vmem:[%s44] sm:$0xff]
  %46 = vst [vmem:[%s43] sm:$0xff] %v45
  %s47 = scalar_lea.vmem %s2, 88
  %s48 = scalar_lea.vmem %s0, 88
  %v49 = vld [vmem:[%s48] sm:$0xff]
  %50 = vst [vmem:[%s47] sm:$0xff] %v49
  %s51 = scalar_lea.vmem %s2, 96
  %s52 = scalar_lea.vmem %s0, 96
  %v53 = vld [vmem:[%s52] sm:$0xff]
  %54 = vst [vmem:[%s51] sm:$0xff] %v53
  %s55 = scalar_lea.vmem %s2, 104
  %s56 = scalar_lea.vmem %s0, 104
  %v57 = vld [vmem:[%s56] sm:$0xff]
  %58 = vst [vmem:[%s55] sm:$0xff] %v57
  %s59 = scalar_lea.vmem %s2, 112
  %s60 = scalar_lea.vmem %s0, 112
  %v61 = vld [vmem:[%s60] sm:$0xff]
  %62 = vst [vmem:[%s59] sm:$0xff] %v61
  %s63 = scalar_lea.vmem %s2, 120
  %s64 = scalar_lea.vmem %s0, 120
  %v65 = vld [vmem:[%s64] sm:$0xff]
  %66 = vst [vmem:[%s63] sm:$0xff] %v65
  %v67 = vld [vmem:[%s1] sm:$0xff]
  %68 = vst [vmem:[%s4] sm:$0xff] %v67
  %s69 = scalar_lea.vmem %s4, 8
  %s70 = scalar_lea.vmem %s1, 8
  %v71 = vld [vmem:[%s70] sm:$0xff]
  %72 = vst [vmem:[%s69] sm:$0xff] %v71
  %s73 = scalar_lea.vmem %s4, 16
  %s74 = scalar_lea.vmem %s1, 16
  %v75 = vld [vmem:[%s74] sm:$0xff]
  %76 = vst [vmem:[%s73] sm:$0xff] %v75
  %s77 = scalar_lea.vmem %s4, 24
  %s78 = scalar_lea.vmem %s1, 24
  %v79 = vld [vmem:[%s78] sm:$0xff]
  %80 = vst [vmem:[%s77] sm:$0xff] %v79
  %s81 = scalar_lea.vmem %s4, 32
  %s82 = scalar_lea.vmem %s1, 32
  %v83 = vld [vmem:[%s82] sm:$0xff]
  %84 = vst [vmem:[%s81] sm:$0xff] %v83
  %s85 = scalar_lea.vmem %s4, 40
  %s86 = scalar_lea.vmem %s1, 40
  %v87 = vld [vmem:[%s86] sm:$0xff]
  %88 = vst [vmem:[%s85] sm:$0xff] %v87
  %s89 = scalar_lea.vmem %s4, 48
  %s90 = scalar_lea.vmem %s1, 48
  %v91 = vld [vmem:[%s90] sm:$0xff]
  %92 = vst [vmem:[%s89] sm:$0xff] %v91
  %s93 = scalar_lea.vmem %s4, 56
  %s94 = scalar_lea.vmem %s1, 56
  %v95 = vld [vmem:[%s94] sm:$0xff]
  %96 = vst [vmem:[%s93] sm:$0xff] %v95
  %s97 = scalar_lea.vmem %s4, 64
  %s98 = scalar_lea.vmem %s1, 64
  %v99 = vld [vmem:[%s98] sm:$0xff]
  %100 = vst [vmem:[%s97] sm:$0xff] %v99
  %s101 = scalar_lea.vmem %s4, 72
  %s102 = scalar_lea.vmem %s1, 72
  %v103 = vld [vmem:[%s102] sm:$0xff]
  %104 = vst [vmem:[%s101] sm:$0xff] %v103
  %s105 = scalar_lea.vmem %s4, 80
  %s106 = scalar_lea.vmem %s1, 80
  %v107 = vld [vmem:[%s106] sm:$0xff]
  %108 = vst [vmem:[%s105] sm:$0xff] %v107
  %s109 = scalar_lea.vmem %s4, 88
  %s110 = scalar_lea.vmem %s1, 88
  %v111 = vld [vmem:[%s110] sm:$0xff]
  %112 = vst [vmem:[%s109] sm:$0xff] %v111
  %s113 = scalar_lea.vmem %s4, 96
  %s114 = scalar_lea.vmem %s1, 96
  %v115 = vld [vmem:[%s114] sm:$0xff]
  %116 = vst [vmem:[%s113] sm:$0xff] %v115
  %s117 = scalar_lea.vmem %s4, 104
  %s118 = scalar_lea.vmem %s1, 104
  %v119 = vld [vmem:[%s118] sm:$0xff]
  %120 = vst [vmem:[%s117] sm:$0xff] %v119
  %s121 = scalar_lea.vmem %s4, 112
  %s122 = scalar_lea.vmem %s1, 112
  %v123 = vld [vmem:[%s122] sm:$0xff]
  %124 = vst [vmem:[%s121] sm:$0xff] %v123
  %s125 = scalar_lea.vmem %s4, 120
  %s126 = scalar_lea.vmem %s1, 120
  %v127 = vld [vmem:[%s126] sm:$0xff]
  %128 = vst [vmem:[%s125] sm:$0xff] %v127

// kernel: custom-call.4
$region0: #{custom-call.4}
  %s0 = inlined_call_operand.vmem [shape: f32[2,4,1,4,4], index: 0, kind: input, shape index: {}]
  %s1 = inlined_call_operand.vmem [shape: f32[2,4,1,4,4], index: 1, kind: input, shape index: {}]
  %s2 = inlined_call_operand.vmem [shape: c64[2,4,1,4,4], index: 2, kind: output, shape index: {}]
  %s4 = scalar_lea.vmem %s2, 128
  %v5 = vld [vmem:[%s0] sm:$0xff]
  %6 = vst [vmem:[%s2] sm:$0xff] %v5
  %s7 = scalar_lea.vmem %s2, 8
  %s8 = scalar_lea.vmem %s0, 8
  %v9 = vld [vmem:[%s8] sm:$0xff]
  %10 = vst [vmem:[%s7] sm:$0xff] %v9
  %s11 = scalar_lea.vmem %s2, 16
  %s12 = scalar_lea.vmem %s0, 16
  %v13 = vld [vmem:[%s12] sm:$0xff]
  %14 = vst [vmem:[%s11] sm:$0xff] %v13
  %s15 = scalar_lea.vmem %s2, 24
  %s16 = scalar_lea.vmem %s0, 24
  %v17 = vld [vmem:[%s16] sm:$0xff]
  %18 = vst [vmem:[%s15] sm:$0xff] %v17
  %s19 = scalar_lea.vmem %s2, 32
  %s20 = scalar_lea.vmem %s0, 32
  %v21 = vld [vmem:[%s20] sm:$0xff]
  %22 = vst [vmem:[%s19] sm:$0xff] %v21
  %s23 = scalar_lea.vmem %s2, 40
  %s24 = scalar_lea.vmem %s0, 40
  %v25 = vld [vmem:[%s24] sm:$0xff]
  %26 = vst [vmem:[%s23] sm:$0xff] %v25
  %s27 = scalar_lea.vmem %s2, 48
  %s28 = scalar_lea.vmem %s0, 48
  %v29 = vld [vmem:[%s28] sm:$0xff]
  %30 = vst [vmem:[%s27] sm:$0xff] %v29
  %s31 = scalar_lea.vmem %s2, 56
  %s32 = scalar_lea.vmem %s0, 56
  %v33 = vld [vmem:[%s32] sm:$0xff]
  %34 = vst [vmem:[%s31] sm:$0xff] %v33
  %s35 = scalar_lea.vmem %s2, 64
  %s36 = scalar_lea.vmem %s0, 64
  %v37 = vld [vmem:[%s36] sm:$0xff]
  %38 = vst [vmem:[%s35] sm:$0xff] %v37
  %s39 = scalar_lea.vmem %s2, 72
  %s40 = scalar_lea.vmem %s0, 72
  %v41 = vld [vmem:[%s40] sm:$0xff]
  %42 = vst [vmem:[%s39] sm:$0xff] %v41
  %s43 = scalar_lea.vmem %s2, 80
  %s44 = scalar_lea.vmem %s0, 80
  %v45 = vld [vmem:[%s44] sm:$0xff]
  %46 = vst [vmem:[%s43] sm:$0xff] %v45
  %s47 = scalar_lea.vmem %s2, 88
  %s48 = scalar_lea.vmem %s0, 88
  %v49 = vld [vmem:[%s48] sm:$0xff]
  %50 = vst [vmem:[%s47] sm:$0xff] %v49
  %s51 = scalar_lea.vmem %s2, 96
  %s52 = scalar_lea.vmem %s0, 96
  %v53 = vld [vmem:[%s52] sm:$0xff]
  %54 = vst [vmem:[%s51] sm:$0xff] %v53
  %s55 = scalar_lea.vmem %s2, 104
  %s56 = scalar_lea.vmem %s0, 104
  %v57 = vld [vmem:[%s56] sm:$0xff]
  %58 = vst [vmem:[%s55] sm:$0xff] %v57
  %s59 = scalar_lea.vmem %s2, 112
  %s60 = scalar_lea.vmem %s0, 112
  %v61 = vld [vmem:[%s60] sm:$0xff]
  %62 = vst [vmem:[%s59] sm:$0xff] %v61
  %s63 = scalar_lea.vmem %s2, 120
  %s64 = scalar_lea.vmem %s0, 120
  %v65 = vld [vmem:[%s64] sm:$0xff]
  %66 = vst [vmem:[%s63] sm:$0xff] %v65
  %v67 = vld [vmem:[%s1] sm:$0xff]
  %68 = vst [vmem:[%s4] sm:$0xff] %v67
  %s69 = scalar_lea.vmem %s4, 8
  %s70 = scalar_lea.vmem %s1, 8
  %v71 = vld [vmem:[%s70] sm:$0xff]
  %72 = vst [vmem:[%s69] sm:$0xff] %v71
  %s73 = scalar_lea.vmem %s4, 16
  %s74 = scalar_lea.vmem %s1, 16
  %v75 = vld [vmem:[%s74] sm:$0xff]
  %76 = vst [vmem:[%s73] sm:$0xff] %v75
  %s77 = scalar_lea.vmem %s4, 24
  %s78 = scalar_lea.vmem %s1, 24
  %v79 = vld [vmem:[%s78] sm:$0xff]
  %80 = vst [vmem:[%s77] sm:$0xff] %v79
  %s81 = scalar_lea.vmem %s4, 32
  %s82 = scalar_lea.vmem %s1, 32
  %v83 = vld [vmem:[%s82] sm:$0xff]
  %84 = vst [vmem:[%s81] sm:$0xff] %v83
  %s85 = scalar_lea.vmem %s4, 40
  %s86 = scalar_lea.vmem %s1, 40
  %v87 = vld [vmem:[%s86] sm:$0xff]
  %88 = vst [vmem:[%s85] sm:$0xff] %v87
  %s89 = scalar_lea.vmem %s4, 48
  %s90 = scalar_lea.vmem %s1, 48
  %v91 = vld [vmem:[%s90] sm:$0xff]
  %92 = vst [vmem:[%s89] sm:$0xff] %v91
  %s93 = scalar_lea.vmem %s4, 56
  %s94 = scalar_lea.vmem %s1, 56
  %v95 = vld [vmem:[%s94] sm:$0xff]
  %96 = vst [vmem:[%s93] sm:$0xff] %v95
  %s97 = scalar_lea.vmem %s4, 64
  %s98 = scalar_lea.vmem %s1, 64
  %v99 = vld [vmem:[%s98] sm:$0xff]
  %100 = vst [vmem:[%s97] sm:$0xff] %v99
  %s101 = scalar_lea.vmem %s4, 72
  %s102 = scalar_lea.vmem %s1, 72
  %v103 = vld [vmem:[%s102] sm:$0xff]
  %104 = vst [vmem:[%s101] sm:$0xff] %v103
  %s105 = scalar_lea.vmem %s4, 80
  %s106 = scalar_lea.vmem %s1, 80
  %v107 = vld [vmem:[%s106] sm:$0xff]
  %108 = vst [vmem:[%s105] sm:$0xff] %v107
  %s109 = scalar_lea.vmem %s4, 88
  %s110 = scalar_lea.vmem %s1, 88
  %v111 = vld [vmem:[%s110] sm:$0xff]
  %112 = vst [vmem:[%s109] sm:$0xff] %v111
  %s113 = scalar_lea.vmem %s4, 96
  %s114 = scalar_lea.vmem %s1, 96
  %v115 = vld [vmem:[%s114] sm:$0xff]
  %116 = vst [vmem:[%s113] sm:$0xff] %v115
  %s117 = scalar_lea.vmem %s4, 104
  %s118 = scalar_lea.vmem %s1, 104
  %v119 = vld [vmem:[%s118] sm:$0xff]
  %120 = vst [vmem:[%s117] sm:$0xff] %v119
  %s121 = scalar_lea.vmem %s4, 112
  %s122 = scalar_lea.vmem %s1, 112
  %v123 = vld [vmem:[%s122] sm:$0xff]
  %124 = vst [vmem:[%s121] sm:$0xff] %v123
  %s125 = scalar_lea.vmem %s4, 120
  %s126 = scalar_lea.vmem %s1, 120
  %v127 = vld [vmem:[%s126] sm:$0xff]
  %128 = vst [vmem:[%s125] sm:$0xff] %v127

// kernel: custom-call.3
$region0: #{custom-call.3}
  %s0 = inlined_call_operand.vmem [shape: f32[2,4,4,4,4], index: 0, kind: input, shape index: {}]
  %s1 = inlined_call_operand.vmem [shape: f32[2,4,4,4,4], index: 1, kind: input, shape index: {}]
  %s2 = inlined_call_operand.vmem [shape: c64[2,4,4,4,4], index: 2, kind: output, shape index: {}]
  %s4 = scalar_lea.vmem %s2, 128
  %v5 = vld [vmem:[%s0] sm:$0xff]
  %6 = vst [vmem:[%s2] sm:$0xff] %v5
  %s7 = scalar_lea.vmem %s2, 8
  %s8 = scalar_lea.vmem %s0, 8
  %v9 = vld [vmem:[%s8] sm:$0xff]
  %10 = vst [vmem:[%s7] sm:$0xff] %v9
  %s11 = scalar_lea.vmem %s2, 16
  %s12 = scalar_lea.vmem %s0, 16
  %v13 = vld [vmem:[%s12] sm:$0xff]
  %14 = vst [vmem:[%s11] sm:$0xff] %v13
  %s15 = scalar_lea.vmem %s2, 24
  %s16 = scalar_lea.vmem %s0, 24
  %v17 = vld [vmem:[%s16] sm:$0xff]
  %18 = vst [vmem:[%s15] sm:$0xff] %v17
  %s19 = scalar_lea.vmem %s2, 32
  %s20 = scalar_lea.vmem %s0, 32
  %v21 = vld [vmem:[%s20] sm:$0xff]
  %22 = vst [vmem:[%s19] sm:$0xff] %v21
  %s23 = scalar_lea.vmem %s2, 40
  %s24 = scalar_lea.vmem %s0, 40
  %v25 = vld [vmem:[%s24] sm:$0xff]
  %26 = vst [vmem:[%s23] sm:$0xff] %v25
  %s27 = scalar_lea.vmem %s2, 48
  %s28 = scalar_lea.vmem %s0, 48
  %v29 = vld [vmem:[%s28] sm:$0xff]
  %30 = vst [vmem:[%s27] sm:$0xff] %v29
  %s31 = scalar_lea.vmem %s2, 56
  %s32 = scalar_lea.vmem %s0, 56
  %v33 = vld [vmem:[%s32] sm:$0xff]
  %34 = vst [vmem:[%s31] sm:$0xff] %v33
  %s35 = scalar_lea.vmem %s2, 64
  %s36 = scalar_lea.vmem %s0, 64
  %v37 = vld [vmem:[%s36] sm:$0xff]
  %38 = vst [vmem:[%s35] sm:$0xff] %v37
  %s39 = scalar_lea.vmem %s2, 72
  %s40 = scalar_lea.vmem %s0, 72
  %v41 = vld [vmem:[%s40] sm:$0xff]
  %42 = vst [vmem:[%s39] sm:$0xff] %v41
  %s43 = scalar_lea.vmem %s2, 80
  %s44 = scalar_lea.vmem %s0, 80
  %v45 = vld [vmem:[%s44] sm:$0xff]
  %46 = vst [vmem:[%s43] sm:$0xff] %v45
  %s47 = scalar_lea.vmem %s2, 88
  %s48 = scalar_lea.vmem %s0, 88
  %v49 = vld [vmem:[%s48] sm:$0xff]
  %50 = vst [vmem:[%s47] sm:$0xff] %v49
  %s51 = scalar_lea.vmem %s2, 96
  %s52 = scalar_lea.vmem %s0, 96
  %v53 = vld [vmem:[%s52] sm:$0xff]
  %54 = vst [vmem:[%s51] sm:$0xff] %v53
  %s55 = scalar_lea.vmem %s2, 104
  %s56 = scalar_lea.vmem %s0, 104
  %v57 = vld [vmem:[%s56] sm:$0xff]
  %58 = vst [vmem:[%s55] sm:$0xff] %v57
  %s59 = scalar_lea.vmem %s2, 112
  %s60 = scalar_lea.vmem %s0, 112
  %v61 = vld [vmem:[%s60] sm:$0xff]
  %62 = vst [vmem:[%s59] sm:$0xff] %v61
  %s63 = scalar_lea.vmem %s2, 120
  %s64 = scalar_lea.vmem %s0, 120
  %v65 = vld [vmem:[%s64] sm:$0xff]
  %66 = vst [vmem:[%s63] sm:$0xff] %v65
  %v67 = vld [vmem:[%s1] sm:$0xff]
  %68 = vst [vmem:[%s4] sm:$0xff] %v67
  %s69 = scalar_lea.vmem %s4, 8
  %s70 = scalar_lea.vmem %s1, 8
  %v71 = vld [vmem:[%s70] sm:$0xff]
  %72 = vst [vmem:[%s69] sm:$0xff] %v71
  %s73 = scalar_lea.vmem %s4, 16
  %s74 = scalar_lea.vmem %s1, 16
  %v75 = vld [vmem:[%s74] sm:$0xff]
  %76 = vst [vmem:[%s73] sm:$0xff] %v75
  %s77 = scalar_lea.vmem %s4, 24
  %s78 = scalar_lea.vmem %s1, 24
  %v79 = vld [vmem:[%s78] sm:$0xff]
  %80 = vst [vmem:[%s77] sm:$0xff] %v79
  %s81 = scalar_lea.vmem %s4, 32
  %s82 = scalar_lea.vmem %s1, 32
  %v83 = vld [vmem:[%s82] sm:$0xff]
  %84 = vst [vmem:[%s81] sm:$0xff] %v83
  %s85 = scalar_lea.vmem %s4, 40
  %s86 = scalar_lea.vmem %s1, 40
  %v87 = vld [vmem:[%s86] sm:$0xff]
  %88 = vst [vmem:[%s85] sm:$0xff] %v87
  %s89 = scalar_lea.vmem %s4, 48
  %s90 = scalar_lea.vmem %s1, 48
  %v91 = vld [vmem:[%s90] sm:$0xff]
  %92 = vst [vmem:[%s89] sm:$0xff] %v91
  %s93 = scalar_lea.vmem %s4, 56
  %s94 = scalar_lea.vmem %s1, 56
  %v95 = vld [vmem:[%s94] sm:$0xff]
  %96 = vst [vmem:[%s93] sm:$0xff] %v95
  %s97 = scalar_lea.vmem %s4, 64
  %s98 = scalar_lea.vmem %s1, 64
  %v99 = vld [vmem:[%s98] sm:$0xff]
  %100 = vst [vmem:[%s97] sm:$0xff] %v99
  %s101 = scalar_lea.vmem %s4, 72
  %s102 = scalar_lea.vmem %s1, 72
  %v103 = vld [vmem:[%s102] sm:$0xff]
  %104 = vst [vmem:[%s101] sm:$0xff] %v103
  %s105 = scalar_lea.vmem %s4, 80
  %s106 = scalar_lea.vmem %s1, 80
  %v107 = vld [vmem:[%s106] sm:$0xff]
  %108 = vst [vmem:[%s105] sm:$0xff] %v107
  %s109 = scalar_lea.vmem %s4, 88
  %s110 = scalar_lea.vmem %s1, 88
  %v111 = vld [vmem:[%s110] sm:$0xff]
  %112 = vst [vmem:[%s109] sm:$0xff] %v111
  %s113 = scalar_lea.vmem %s4, 96
  %s114 = scalar_lea.vmem %s1, 96
  %v115 = vld [vmem:[%s114] sm:$0xff]
  %116 = vst [vmem:[%s113] sm:$0xff] %v115
  %s117 = scalar_lea.vmem %s4, 104
  %s118 = scalar_lea.vmem %s1, 104
  %v119 = vld [vmem:[%s118] sm:$0xff]
  %120 = vst [vmem:[%s117] sm:$0xff] %v119
  %s121 = scalar_lea.vmem %s4, 112
  %s122 = scalar_lea.vmem %s1, 112
  %v123 = vld [vmem:[%s122] sm:$0xff]
  %124 = vst [vmem:[%s121] sm:$0xff] %v123
  %s125 = scalar_lea.vmem %s4, 120
  %s126 = scalar_lea.vmem %s1, 120
  %v127 = vld [vmem:[%s126] sm:$0xff]
  %128 = vst [vmem:[%s125] sm:$0xff] %v127

// kernel: custom-call.2
$region0: #{custom-call.2}
  %s0 = inlined_call_operand.vmem [shape: f32[2,4,4,8,8], index: 0, kind: input, shape index: {}]
  %s1 = inlined_call_operand.vmem [shape: f32[2,4,4,8,8], index: 1, kind: input, shape index: {}]
  %s2 = inlined_call_operand.vmem [shape: c64[2,4,4,8,8], index: 2, kind: output, shape index: {}]
  %s4 = scalar_lea.vmem %s2, 256
  %v5 = vld [vmem:[%s0] sm:$0xff]
  %6 = vst [vmem:[%s2] sm:$0xff] %v5
  %s7 = scalar_lea.vmem %s2, 8
  %s8 = scalar_lea.vmem %s0, 8
  %v9 = vld [vmem:[%s8] sm:$0xff]
  %10 = vst [vmem:[%s7] sm:$0xff] %v9
  %s11 = scalar_lea.vmem %s2, 16
  %s12 = scalar_lea.vmem %s0, 16
  %v13 = vld [vmem:[%s12] sm:$0xff]
  %14 = vst [vmem:[%s11] sm:$0xff] %v13
  %s15 = scalar_lea.vmem %s2, 24
  %s16 = scalar_lea.vmem %s0, 24
  %v17 = vld [vmem:[%s16] sm:$0xff]
  %18 = vst [vmem:[%s15] sm:$0xff] %v17
  %s19 = scalar_lea.vmem %s2, 32
  %s20 = scalar_lea.vmem %s0, 32
  %v21 = vld [vmem:[%s20] sm:$0xff]
  %22 = vst [vmem:[%s19] sm:$0xff] %v21
  %s23 = scalar_lea.vmem %s2, 40
  %s24 = scalar_lea.vmem %s0, 40
  %v25 = vld [vmem:[%s24] sm:$0xff]
  %26 = vst [vmem:[%s23] sm:$0xff] %v25
  %s27 = scalar_lea.vmem %s2, 48
  %s28 = scalar_lea.vmem %s0, 48
  %v29 = vld [vmem:[%s28] sm:$0xff]
  %30 = vst [vmem:[%s27] sm:$0xff] %v29
  %s31 = scalar_lea.vmem %s2, 56
  %s32 = scalar_lea.vmem %s0, 56
  %v33 = vld [vmem:[%s32] sm:$0xff]
  %34 = vst [vmem:[%s31] sm:$0xff] %v33
  %s35 = scalar_lea.vmem %s2, 64
  %s36 = scalar_lea.vmem %s0, 64
  %v37 = vld [vmem:[%s36] sm:$0xff]
  %38 = vst [vmem:[%s35] sm:$0xff] %v37
  %s39 = scalar_lea.vmem %s2, 72
  %s40 = scalar_lea.vmem %s0, 72
  %v41 = vld [vmem:[%s40] sm:$0xff]
  %42 = vst [vmem:[%s39] sm:$0xff] %v41
  %s43 = scalar_lea.vmem %s2, 80
  %s44 = scalar_lea.vmem %s0, 80
  %v45 = vld [vmem:[%s44] sm:$0xff]
  %46 = vst [vmem:[%s43] sm:$0xff] %v45
  %s47 = scalar_lea.vmem %s2, 88
  %s48 = scalar_lea.vmem %s0, 88
  %v49 = vld [vmem:[%s48] sm:$0xff]
  %50 = vst [vmem:[%s47] sm:$0xff] %v49
  %s51 = scalar_lea.vmem %s2, 96
  %s52 = scalar_lea.vmem %s0, 96
  %v53 = vld [vmem:[%s52] sm:$0xff]
  %54 = vst [vmem:[%s51] sm:$0xff] %v53
  %s55 = scalar_lea.vmem %s2, 104
  %s56 = scalar_lea.vmem %s0, 104
  %v57 = vld [vmem:[%s56] sm:$0xff]
  %58 = vst [vmem:[%s55] sm:$0xff] %v57
  %s59 = scalar_lea.vmem %s2, 112
  %s60 = scalar_lea.vmem %s0, 112
  %v61 = vld [vmem:[%s60] sm:$0xff]
  %62 = vst [vmem:[%s59] sm:$0xff] %v61
  %s63 = scalar_lea.vmem %s2, 120
  %s64 = scalar_lea.vmem %s0, 120
  %v65 = vld [vmem:[%s64] sm:$0xff]
  %66 = vst [vmem:[%s63] sm:$0xff] %v65
  %s67 = scalar_lea.vmem %s2, 128
  %s68 = scalar_lea.vmem %s0, 128
  %v69 = vld [vmem:[%s68] sm:$0xff]
  %70 = vst [vmem:[%s67] sm:$0xff] %v69
  %s71 = scalar_lea.vmem %s2, 136
  %s72 = scalar_lea.vmem %s0, 136
  %v73 = vld [vmem:[%s72] sm:$0xff]
  %74 = vst [vmem:[%s71] sm:$0xff] %v73
  %s75 = scalar_lea.vmem %s2, 144
  %s76 = scalar_lea.vmem %s0, 144
  %v77 = vld [vmem:[%s76] sm:$0xff]
  %78 = vst [vmem:[%s75] sm:$0xff] %v77
  %s79 = scalar_lea.vmem %s2, 152
  %s80 = scalar_lea.vmem %s0, 152
  %v81 = vld [vmem:[%s80] sm:$0xff]
  %82 = vst [vmem:[%s79] sm:$0xff] %v81
  %s83 = scalar_lea.vmem %s2, 160
  %s84 = scalar_lea.vmem %s0, 160
  %v85 = vld [vmem:[%s84] sm:$0xff]
  %86 = vst [vmem:[%s83] sm:$0xff] %v85
  %s87 = scalar_lea.vmem %s2, 168
  %s88 = scalar_lea.vmem %s0, 168
  %v89 = vld [vmem:[%s88] sm:$0xff]
  %90 = vst [vmem:[%s87] sm:$0xff] %v89
  %s91 = scalar_lea.vmem %s2, 176
  %s92 = scalar_lea.vmem %s0, 176
  %v93 = vld [vmem:[%s92] sm:$0xff]
  %94 = vst [vmem:[%s91] sm:$0xff] %v93
  %s95 = scalar_lea.vmem %s2, 184
  %s96 = scalar_lea.vmem %s0, 184
  %v97 = vld [vmem:[%s96] sm:$0xff]
  %98 = vst [vmem:[%s95] sm:$0xff] %v97
  %s99 = scalar_lea.vmem %s2, 192
  %s100 = scalar_lea.vmem %s0, 192
  %v101 = vld [vmem:[%s100] sm:$0xff]
  %102 = vst [vmem:[%s99] sm:$0xff] %v101
  %s103 = scalar_lea.vmem %s2, 200
  %s104 = scalar_lea.vmem %s0, 200
  %v105 = vld [vmem:[%s104] sm:$0xff]
  %106 = vst [vmem:[%s103] sm:$0xff] %v105
  %s107 = scalar_lea.vmem %s2, 208
  %s108 = scalar_lea.vmem %s0, 208
  %v109 = vld [vmem:[%s108] sm:$0xff]
  %110 = vst [vmem:[%s107] sm:$0xff] %v109
  %s111 = scalar_lea.vmem %s2, 216
  %s112 = scalar_lea.vmem %s0, 216
  %v113 = vld [vmem:[%s112] sm:$0xff]
  %114 = vst [vmem:[%s111] sm:$0xff] %v113
  %s115 = scalar_lea.vmem %s2, 224
  %s116 = scalar_lea.vmem %s0, 224
  %v117 = vld [vmem:[%s116] sm:$0xff]
  %118 = vst [vmem:[%s115] sm:$0xff] %v117
  %s119 = scalar_lea.vmem %s2, 232
  %s120 = scalar_lea.vmem %s0, 232
  %v121 = vld [vmem:[%s120] sm:$0xff]
  %122 = vst [vmem:[%s119] sm:$0xff] %v121
  %s123 = scalar_lea.vmem %s2, 240
  %s124 = scalar_lea.vmem %s0, 240
  %v125 = vld [vmem:[%s124] sm:$0xff]
  %126 = vst [vmem:[%s123] sm:$0xff] %v125
  %s127 = scalar_lea.vmem %s2, 248
  %s128 = scalar_lea.vmem %s0, 248
  %v129 = vld [vmem:[%s128] sm:$0xff]
  %130 = vst [vmem:[%s127] sm:$0xff] %v129
  %v131 = vld [vmem:[%s1] sm:$0xff]
  %132 = vst [vmem:[%s4] sm:$0xff] %v131
  %s133 = scalar_lea.vmem %s4, 8
  %s134 = scalar_lea.vmem %s1, 8
  %v135 = vld [vmem:[%s134] sm:$0xff]
  %136 = vst [vmem:[%s133] sm:$0xff] %v135
  %s137 = scalar_lea.vmem %s4, 16
  %s138 = scalar_lea.vmem %s1, 16
  %v139 = vld [vmem:[%s138] sm:$0xff]
  %140 = vst [vmem:[%s137] sm:$0xff] %v139
  %s141 = scalar_lea.vmem %s4, 24
  %s142 = scalar_lea.vmem %s1, 24
  %v143 = vld [vmem:[%s142] sm:$0xff]
  %144 = vst [vmem:[%s141] sm:$0xff] %v143
  %s145 = scalar_lea.vmem %s4, 32
  %s146 = scalar_lea.vmem %s1, 32
  %v147 = vld [vmem:[%s146] sm:$0xff]
  %148 = vst [vmem:[%s145] sm:$0xff] %v147
  %s149 = scalar_lea.vmem %s4, 40
  %s150 = scalar_lea.vmem %s1, 40
  %v151 = vld [vmem:[%s150] sm:$0xff]
  %152 = vst [vmem:[%s149] sm:$0xff] %v151
  %s153 = scalar_lea.vmem %s4, 48
  %s154 = scalar_lea.vmem %s1, 48
  %v155 = vld [vmem:[%s154] sm:$0xff]
  %156 = vst [vmem:[%s153] sm:$0xff] %v155
  %s157 = scalar_lea.vmem %s4, 56
  %s158 = scalar_lea.vmem %s1, 56
  %v159 = vld [vmem:[%s158] sm:$0xff]
  %160 = vst [vmem:[%s157] sm:$0xff] %v159
  %s161 = scalar_lea.vmem %s4, 64
  %s162 = scalar_lea.vmem %s1, 64
  %v163 = vld [vmem:[%s162] sm:$0xff]
  %164 = vst [vmem:[%s161] sm:$0xff] %v163
  %s165 = scalar_lea.vmem %s4, 72
  %s166 = scalar_lea.vmem %s1, 72
  %v167 = vld [vmem:[%s166] sm:$0xff]
  %168 = vst [vmem:[%s165] sm:$0xff] %v167
  %s169 = scalar_lea.vmem %s4, 80
  %s170 = scalar_lea.vmem %s1, 80
  %v171 = vld [vmem:[%s170] sm:$0xff]
  %172 = vst [vmem:[%s169] sm:$0xff] %v171
  %s173 = scalar_lea.vmem %s4, 88
  %s174 = scalar_lea.vmem %s1, 88
  %v175 = vld [vmem:[%s174] sm:$0xff]
  %176 = vst [vmem:[%s173] sm:$0xff] %v175
  %s177 = scalar_lea.vmem %s4, 96
  %s178 = scalar_lea.vmem %s1, 96
  %v179 = vld [vmem:[%s178] sm:$0xff]
  %180 = vst [vmem:[%s177] sm:$0xff] %v179
  %s181 = scalar_lea.vmem %s4, 104
  %s182 = scalar_lea.vmem %s1, 104
  %v183 = vld [vmem:[%s182] sm:$0xff]
  %184 = vst [vmem:[%s181] sm:$0xff] %v183
  %s185 = scalar_lea.vmem %s4, 112
  %s186 = scalar_lea.vmem %s1, 112
  %v187 = vld [vmem:[%s186] sm:$0xff]
  %188 = vst [vmem:[%s185] sm:$0xff] %v187
  %s189 = scalar_lea.vmem %s4, 120
  %s190 = scalar_lea.vmem %s1, 120
  %v191 = vld [vmem:[%s190] sm:$0xff]
  %192 = vst [vmem:[%s189] sm:$0xff] %v191
  %s193 = scalar_lea.vmem %s4, 128
  %s194 = scalar_lea.vmem %s1, 128
  %v195 = vld [vmem:[%s194] sm:$0xff]
  %196 = vst [vmem:[%s193] sm:$0xff] %v195
  %s197 = scalar_lea.vmem %s4, 136
  %s198 = scalar_lea.vmem %s1, 136
  %v199 = vld [vmem:[%s198] sm:$0xff]
  %200 = vst [vmem:[%s197] sm:$0xff] %v199
  %s201 = scalar_lea.vmem %s4, 144
  %s202 = scalar_lea.vmem %s1, 144
  %v203 = vld [vmem:[%s202] sm:$0xff]
  %204 = vst [vmem:[%s201] sm:$0xff] %v203
  %s205 = scalar_lea.vmem %s4, 152
  %s206 = scalar_lea.vmem %s1, 152
  %v207 = vld [vmem:[%s206] sm:$0xff]
  %208 = vst [vmem:[%s205] sm:$0xff] %v207
  %s209 = scalar_lea.vmem %s4, 160
  %s210 = scalar_lea.vmem %s1, 160
  %v211 = vld [vmem:[%s210] sm:$0xff]
  %212 = vst [vmem:[%s209] sm:$0xff] %v211
  %s213 = scalar_lea.vmem %s4, 168
  %s214 = scalar_lea.vmem %s1, 168
  %v215 = vld [vmem:[%s214] sm:$0xff]
  %216 = vst [vmem:[%s213] sm:$0xff] %v215
  %s217 = scalar_lea.vmem %s4, 176
  %s218 = scalar_lea.vmem %s1, 176
  %v219 = vld [vmem:[%s218] sm:$0xff]
  %220 = vst [vmem:[%s217] sm:$0xff] %v219
  %s221 = scalar_lea.vmem %s4, 184
  %s222 = scalar_lea.vmem %s1, 184
  %v223 = vld [vmem:[%s222] sm:$0xff]
  %224 = vst [vmem:[%s221] sm:$0xff] %v223
  %s225 = scalar_lea.vmem %s4, 192
  %s226 = scalar_lea.vmem %s1, 192
  %v227 = vld [vmem:[%s226] sm:$0xff]
  %228 = vst [vmem:[%s225] sm:$0xff] %v227
  %s229 = scalar_lea.vmem %s4, 200
  %s230 = scalar_lea.vmem %s1, 200
  %v231 = vld [vmem:[%s230] sm:$0xff]
  %232 = vst [vmem:[%s229] sm:$0xff] %v231
  %s233 = scalar_lea.vmem %s4, 208
  %s234 = scalar_lea.vmem %s1, 208
  %v235 = vld [vmem:[%s234] sm:$0xff]
  %236 = vst [vmem:[%s233] sm:$0xff] %v235
  %s237 = scalar_lea.vmem %s4, 216
  %s238 = scalar_lea.vmem %s1, 216
  %v239 = vld [vmem:[%s238] sm:$0xff]
  %240 = vst [vmem:[%s237] sm:$0xff] %v239
  %s241 = scalar_lea.vmem %s4, 224
  %s242 = scalar_lea.vmem %s1, 224
  %v243 = vld [vmem:[%s242] sm:$0xff]
  %244 = vst [vmem:[%s241] sm:$0xff] %v243
  %s245 = scalar_lea.vmem %s4, 232
  %s246 = scalar_lea.vmem %s1, 232
  %v247 = vld [vmem:[%s246] sm:$0xff]
  %248 = vst [vmem:[%s245] sm:$0xff] %v247
  %s249 = scalar_lea.vmem %s4, 240
  %s250 = scalar_lea.vmem %s1, 240
  %v251 = vld [vmem:[%s250] sm:$0xff]
  %252 = vst [vmem:[%s249] sm:$0xff] %v251
  %s253 = scalar_lea.vmem %s4, 248
  %s254 = scalar_lea.vmem %s1, 248
  %v255 = vld [vmem:[%s254] sm:$0xff]
  %256 = vst [vmem:[%s253] sm:$0xff] %v255

// kernel: custom-call.1
$region0: #{custom-call.1}
  %s0 = inlined_call_operand.vmem [shape: f32[2,4,4,16,16], index: 0, kind: input, shape index: {}]
  %s1 = inlined_call_operand.vmem [shape: f32[2,4,4,16,16], index: 1, kind: input, shape index: {}]
  %s2 = inlined_call_operand.vmem [shape: c64[2,4,4,16,16], index: 2, kind: output, shape index: {}]
  %s4 = scalar_lea.vmem %s2, 512
  %v5 = vld [vmem:[%s0] sm:$0xff]
  %6 = vst [vmem:[%s2] sm:$0xff] %v5
  %s7 = scalar_lea.vmem %s2, 8
  %s8 = scalar_lea.vmem %s0, 8
  %v9 = vld [vmem:[%s8] sm:$0xff]
  %10 = vst [vmem:[%s7] sm:$0xff] %v9
  %s11 = scalar_lea.vmem %s2, 16
  %s12 = scalar_lea.vmem %s0, 16
  %v13 = vld [vmem:[%s12] sm:$0xff]
  %14 = vst [vmem:[%s11] sm:$0xff] %v13
  %s15 = scalar_lea.vmem %s2, 24
  %s16 = scalar_lea.vmem %s0, 24
  %v17 = vld [vmem:[%s16] sm:$0xff]
  %18 = vst [vmem:[%s15] sm:$0xff] %v17
  %s19 = scalar_lea.vmem %s2, 32
  %s20 = scalar_lea.vmem %s0, 32
  %v21 = vld [vmem:[%s20] sm:$0xff]
  %22 = vst [vmem:[%s19] sm:$0xff] %v21
  %s23 = scalar_lea.vmem %s2, 40
  %s24 = scalar_lea.vmem %s0, 40
  %v25 = vld [vmem:[%s24] sm:$0xff]
  %26 = vst [vmem:[%s23] sm:$0xff] %v25
  %s27 = scalar_lea.vmem %s2, 48
  %s28 = scalar_lea.vmem %s0, 48
  %v29 = vld [vmem:[%s28] sm:$0xff]
  %30 = vst [vmem:[%s27] sm:$0xff] %v29
  %s31 = scalar_lea.vmem %s2, 56
  %s32 = scalar_lea.vmem %s0, 56
  %v33 = vld [vmem:[%s32] sm:$0xff]
  %34 = vst [vmem:[%s31] sm:$0xff] %v33
  %s35 = scalar_lea.vmem %s2, 64
  %s36 = scalar_lea.vmem %s0, 64
  %v37 = vld [vmem:[%s36] sm:$0xff]
  %38 = vst [vmem:[%s35] sm:$0xff] %v37
  %s39 = scalar_lea.vmem %s2, 72
  %s40 = scalar_lea.vmem %s0, 72
  %v41 = vld [vmem:[%s40] sm:$0xff]
  %42 = vst [vmem:[%s39] sm:$0xff] %v41
  %s43 = scalar_lea.vmem %s2, 80
  %s44 = scalar_lea.vmem %s0, 80
  %v45 = vld [vmem:[%s44] sm:$0xff]
  %46 = vst [vmem:[%s43] sm:$0xff] %v45
  %s47 = scalar_lea.vmem %s2, 88
  %s48 = scalar_lea.vmem %s0, 88
  %v49 = vld [vmem:[%s48] sm:$0xff]
  %50 = vst [vmem:[%s47] sm:$0xff] %v49
  %s51 = scalar_lea.vmem %s2, 96
  %s52 = scalar_lea.vmem %s0, 96
  %v53 = vld [vmem:[%s52] sm:$0xff]
  %54 = vst [vmem:[%s51] sm:$0xff] %v53
  %s55 = scalar_lea.vmem %s2, 104
  %s56 = scalar_lea.vmem %s0, 104
  %v57 = vld [vmem:[%s56] sm:$0xff]
  %58 = vst [vmem:[%s55] sm:$0xff] %v57
  %s59 = scalar_lea.vmem %s2, 112
  %s60 = scalar_lea.vmem %s0, 112
  %v61 = vld [vmem:[%s60] sm:$0xff]
  %62 = vst [vmem:[%s59] sm:$0xff] %v61
  %s63 = scalar_lea.vmem %s2, 120
  %s64 = scalar_lea.vmem %s0, 120
  %v65 = vld [vmem:[%s64] sm:$0xff]
  %66 = vst [vmem:[%s63] sm:$0xff] %v65
  %s67 = scalar_lea.vmem %s2, 128
  %s68 = scalar_lea.vmem %s0, 128
  %v69 = vld [vmem:[%s68] sm:$0xff]
  %70 = vst [vmem:[%s67] sm:$0xff] %v69
  %s71 = scalar_lea.vmem %s2, 136
  %s72 = scalar_lea.vmem %s0, 136
  %v73 = vld [vmem:[%s72] sm:$0xff]
  %74 = vst [vmem:[%s71] sm:$0xff] %v73
  %s75 = scalar_lea.vmem %s2, 144
  %s76 = scalar_lea.vmem %s0, 144
  %v77 = vld [vmem:[%s76] sm:$0xff]
  %78 = vst [vmem:[%s75] sm:$0xff] %v77
  %s79 = scalar_lea.vmem %s2, 152
  %s80 = scalar_lea.vmem %s0, 152
  %v81 = vld [vmem:[%s80] sm:$0xff]
  %82 = vst [vmem:[%s79] sm:$0xff] %v81
  %s83 = scalar_lea.vmem %s2, 160
  %s84 = scalar_lea.vmem %s0, 160
  %v85 = vld [vmem:[%s84] sm:$0xff]
  %86 = vst [vmem:[%s83] sm:$0xff] %v85
  %s87 = scalar_lea.vmem %s2, 168
  %s88 = scalar_lea.vmem %s0, 168
  %v89 = vld [vmem:[%s88] sm:$0xff]
  %90 = vst [vmem:[%s87] sm:$0xff] %v89
  %s91 = scalar_lea.vmem %s2, 176
  %s92 = scalar_lea.vmem %s0, 176
  %v93 = vld [vmem:[%s92] sm:$0xff]
  %94 = vst [vmem:[%s91] sm:$0xff] %v93
  %s95 = scalar_lea.vmem %s2, 184
  %s96 = scalar_lea.vmem %s0, 184
  %v97 = vld [vmem:[%s96] sm:$0xff]
  %98 = vst [vmem:[%s95] sm:$0xff] %v97
  %s99 = scalar_lea.vmem %s2, 192
  %s100 = scalar_lea.vmem %s0, 192
  %v101 = vld [vmem:[%s100] sm:$0xff]
  %102 = vst [vmem:[%s99] sm:$0xff] %v101
  %s103 = scalar_lea.vmem %s2, 200
  %s104 = scalar_lea.vmem %s0, 200
  %v105 = vld [vmem:[%s104] sm:$0xff]
  %106 = vst [vmem:[%s103] sm:$0xff] %v105
  %s107 = scalar_lea.vmem %s2, 208
  %s108 = scalar_lea.vmem %s0, 208
  %v109 = vld [vmem:[%s108] sm:$0xff]
  %110 = vst [vmem:[%s107] sm:$0xff] %v109
  %s111 = scalar_lea.vmem %s2, 216
  %s112 = scalar_lea.vmem %s0, 216
  %v113 = vld [vmem:[%s112] sm:$0xff]
  %114 = vst [vmem:[%s111] sm:$0xff] %v113
  %s115 = scalar_lea.vmem %s2, 224
  %s116 = scalar_lea.vmem %s0, 224
  %v117 = vld [vmem:[%s116] sm:$0xff]
  %118 = vst [vmem:[%s115] sm:$0xff] %v117
  %s119 = scalar_lea.vmem %s2, 232
  %s120 = scalar_lea.vmem %s0, 232
  %v121 = vld [vmem:[%s120] sm:$0xff]
  %122 = vst [vmem:[%s119] sm:$0xff] %v121
  %s123 = scalar_lea.vmem %s2, 240
  %s124 = scalar_lea.vmem %s0, 240
  %v125 = vld [vmem:[%s124] sm:$0xff]
  %126 = vst [vmem:[%s123] sm:$0xff] %v125
  %s127 = scalar_lea.vmem %s2, 248
  %s128 = scalar_lea.vmem %s0, 248
  %v129 = vld [vmem:[%s128] sm:$0xff]
  %130 = vst [vmem:[%s127] sm:$0xff] %v129
  %s131 = scalar_lea.vmem %s2, 256
  %s132 = scalar_lea.vmem %s0, 256
  %v133 = vld [vmem:[%s132] sm:$0xff]
  %134 = vst [vmem:[%s131] sm:$0xff] %v133
  %s135 = scalar_lea.vmem %s2, 264
  %s136 = scalar_lea.vmem %s0, 264
  %v137 = vld [vmem:[%s136] sm:$0xff]
  %138 = vst [vmem:[%s135] sm:$0xff] %v137
  %s139 = scalar_lea.vmem %s2, 272
  %s140 = scalar_lea.vmem %s0, 272
  %v141 = vld [vmem:[%s140] sm:$0xff]
  %142 = vst [vmem:[%s139] sm:$0xff] %v141
  %s143 = scalar_lea.vmem %s2, 280
  %s144 = scalar_lea.vmem %s0, 280
  %v145 = vld [vmem:[%s144] sm:$0xff]
  %146 = vst [vmem:[%s143] sm:$0xff] %v145
  %s147 = scalar_lea.vmem %s2, 288
  %s148 = scalar_lea.vmem %s0, 288
  %v149 = vld [vmem:[%s148] sm:$0xff]
  %150 = vst [vmem:[%s147] sm:$0xff] %v149
  %s151 = scalar_lea.vmem %s2, 296
  %s152 = scalar_lea.vmem %s0, 296
  %v153 = vld [vmem:[%s152] sm:$0xff]
  %154 = vst [vmem:[%s151] sm:$0xff] %v153
  %s155 = scalar_lea.vmem %s2, 304
  %s156 = scalar_lea.vmem %s0, 304
  %v157 = vld [vmem:[%s156] sm:$0xff]
  %158 = vst [vmem:[%s155] sm:$0xff] %v157
  %s159 = scalar_lea.vmem %s2, 312
  %s160 = scalar_lea.vmem %s0, 312
  %v161 = vld [vmem:[%s160] sm:$0xff]
  %162 = vst [vmem:[%s159] sm:$0xff] %v161
  %s163 = scalar_lea.vmem %s2, 320
  %s164 = scalar_lea.vmem %s0, 320
  %v165 = vld [vmem:[%s164] sm:$0xff]
  %166 = vst [vmem:[%s163] sm:$0xff] %v165
  %s167 = scalar_lea.vmem %s2, 328
  %s168 = scalar_lea.vmem %s0, 328
  %v169 = vld [vmem:[%s168] sm:$0xff]
  %170 = vst [vmem:[%s167] sm:$0xff] %v169
  %s171 = scalar_lea.vmem %s2, 336
  %s172 = scalar_lea.vmem %s0, 336
  %v173 = vld [vmem:[%s172] sm:$0xff]
  %174 = vst [vmem:[%s171] sm:$0xff] %v173
  %s175 = scalar_lea.vmem %s2, 344
  %s176 = scalar_lea.vmem %s0, 344
  %v177 = vld [vmem:[%s176] sm:$0xff]
  %178 = vst [vmem:[%s175] sm:$0xff] %v177
  %s179 = scalar_lea.vmem %s2, 352
  %s180 = scalar_lea.vmem %s0, 352
  %v181 = vld [vmem:[%s180] sm:$0xff]
  %182 = vst [vmem:[%s179] sm:$0xff] %v181
  %s183 = scalar_lea.vmem %s2, 360
  %s184 = scalar_lea.vmem %s0, 360
  %v185 = vld [vmem:[%s184] sm:$0xff]
  %186 = vst [vmem:[%s183] sm:$0xff] %v185
  %s187 = scalar_lea.vmem %s2, 368
  %s188 = scalar_lea.vmem %s0, 368
  %v189 = vld [vmem:[%s188] sm:$0xff]
  %190 = vst [vmem:[%s187] sm:$0xff] %v189
  %s191 = scalar_lea.vmem %s2, 376
  %s192 = scalar_lea.vmem %s0, 376
  %v193 = vld [vmem:[%s192] sm:$0xff]
  %194 = vst [vmem:[%s191] sm:$0xff] %v193
  %s195 = scalar_lea.vmem %s2, 384
  %s196 = scalar_lea.vmem %s0, 384
  %v197 = vld [vmem:[%s196] sm:$0xff]
  %198 = vst [vmem:[%s195] sm:$0xff] %v197
  %s199 = scalar_lea.vmem %s2, 392
  %s200 = scalar_lea.vmem %s0, 392
  %v201 = vld [vmem:[%s200] sm:$0xff]
  %202 = vst [vmem:[%s199] sm:$0xff] %v201
  %s203 = scalar_lea.vmem %s2, 400
  %s204 = scalar_lea.vmem %s0, 400
  %v205 = vld [vmem:[%s204] sm:$0xff]
  %206 = vst [vmem:[%s203] sm:$0xff] %v205
  %s207 = scalar_lea.vmem %s2, 408
  %s208 = scalar_lea.vmem %s0, 408
  %v209 = vld [vmem:[%s208] sm:$0xff]
  %210 = vst [vmem:[%s207] sm:$0xff] %v209
  %s211 = scalar_lea.vmem %s2, 416
  %s212 = scalar_lea.vmem %s0, 416
  %v213 = vld [vmem:[%s212] sm:$0xff]
  %214 = vst [vmem:[%s211] sm:$0xff] %v213
  %s215 = scalar_lea.vmem %s2, 424
  %s216 = scalar_lea.vmem %s0, 424
  %v217 = vld [vmem:[%s216] sm:$0xff]
  %218 = vst [vmem:[%s215] sm:$0xff] %v217
  %s219 = scalar_lea.vmem %s2, 432
  %s220 = scalar_lea.vmem %s0, 432
  %v221 = vld [vmem:[%s220] sm:$0xff]
  %222 = vst [vmem:[%s219] sm:$0xff] %v221
  %s223 = scalar_lea.vmem %s2, 440
  %s224 = scalar_lea.vmem %s0, 440
  %v225 = vld [vmem:[%s224] sm:$0xff]
  %226 = vst [vmem:[%s223] sm:$0xff] %v225
  %s227 = scalar_lea.vmem %s2, 448
  %s228 = scalar_lea.vmem %s0, 448
  %v229 = vld [vmem:[%s228] sm:$0xff]
  %230 = vst [vmem:[%s227] sm:$0xff] %v229
  %s231 = scalar_lea.vmem %s2, 456
  %s232 = scalar_lea.vmem %s0, 456
  %v233 = vld [vmem:[%s232] sm:$0xff]
  %234 = vst [vmem:[%s231] sm:$0xff] %v233
  %s235 = scalar_lea.vmem %s2, 464
  %s236 = scalar_lea.vmem %s0, 464
  %v237 = vld [vmem:[%s236] sm:$0xff]
  %238 = vst [vmem:[%s235] sm:$0xff] %v237
  %s239 = scalar_lea.vmem %s2, 472
  %s240 = scalar_lea.vmem %s0, 472
  %v241 = vld [vmem:[%s240] sm:$0xff]
  %242 = vst [vmem:[%s239] sm:$0xff] %v241
  %s243 = scalar_lea.vmem %s2, 480
  %s244 = scalar_lea.vmem %s0, 480
  %v245 = vld [vmem:[%s244] sm:$0xff]
  %246 = vst [vmem:[%s243] sm:$0xff] %v245
  %s247 = scalar_lea.vmem %s2, 488
  %s248 = scalar_lea.vmem %s0, 488
  %v249 = vld [vmem:[%s248] sm:$0xff]
  %250 = vst [vmem:[%s247] sm:$0xff] %v249
  %s251 = scalar_lea.vmem %s2, 496
  %s252 = scalar_lea.vmem %s0, 496
  %v253 = vld [vmem:[%s252] sm:$0xff]
  %254 = vst [vmem:[%s251] sm:$0xff] %v253
  %s255 = scalar_lea.vmem %s2, 504
  %s256 = scalar_lea.vmem %s0, 504
  %v257 = vld [vmem:[%s256] sm:$0xff]
  %258 = vst [vmem:[%s255] sm:$0xff] %v257
  %v259 = vld [vmem:[%s1] sm:$0xff]
  %260 = vst [vmem:[%s4] sm:$0xff] %v259
  %s261 = scalar_lea.vmem %s4, 8
  %s262 = scalar_lea.vmem %s1, 8
  %v263 = vld [vmem:[%s262] sm:$0xff]
  %264 = vst [vmem:[%s261] sm:$0xff] %v263
  %s265 = scalar_lea.vmem %s4, 16
  %s266 = scalar_lea.vmem %s1, 16
  %v267 = vld [vmem:[%s266] sm:$0xff]
  %268 = vst [vmem:[%s265] sm:$0xff] %v267
  %s269 = scalar_lea.vmem %s4, 24
  %s270 = scalar_lea.vmem %s1, 24
  %v271 = vld [vmem:[%s270] sm:$0xff]
  %272 = vst [vmem:[%s269] sm:$0xff] %v271
  %s273 = scalar_lea.vmem %s4, 32
  %s274 = scalar_lea.vmem %s1, 32
  %v275 = vld [vmem:[%s274] sm:$0xff]
  %276 = vst [vmem:[%s273] sm:$0xff] %v275
  %s277 = scalar_lea.vmem %s4, 40
  %s278 = scalar_lea.vmem %s1, 40
  %v279 = vld [vmem:[%s278] sm:$0xff]
  %280 = vst [vmem:[%s277] sm:$0xff] %v279
  %s281 = scalar_lea.vmem %s4, 48
  %s282 = scalar_lea.vmem %s1, 48
  %v283 = vld [vmem:[%s282] sm:$0xff]
  %284 = vst [vmem:[%s281] sm:$0xff] %v283
  %s285 = scalar_lea.vmem %s4, 56
  %s286 = scalar_lea.vmem %s1, 56
  %v287 = vld [vmem:[%s286] sm:$0xff]
  %288 = vst [vmem:[%s285] sm:$0xff] %v287
  %s289 = scalar_lea.vmem %s4, 64
  %s290 = scalar_lea.vmem %s1, 64
  %v291 = vld [vmem:[%s290] sm:$0xff]
  %292 = vst [vmem:[%s289] sm:$0xff] %v291
  %s293 = scalar_lea.vmem %s4, 72
  %s294 = scalar_lea.vmem %s1, 72
  %v295 = vld [vmem:[%s294] sm:$0xff]
  %296 = vst [vmem:[%s293] sm:$0xff] %v295
  %s297 = scalar_lea.vmem %s4, 80
  %s298 = scalar_lea.vmem %s1, 80
  %v299 = vld [vmem:[%s298] sm:$0xff]
  %300 = vst [vmem:[%s297] sm:$0xff] %v299
  %s301 = scalar_lea.vmem %s4, 88
  %s302 = scalar_lea.vmem %s1, 88
  %v303 = vld [vmem:[%s302] sm:$0xff]
  %304 = vst [vmem:[%s301] sm:$0xff] %v303
  %s305 = scalar_lea.vmem %s4, 96
  %s306 = scalar_lea.vmem %s1, 96
  %v307 = vld [vmem:[%s306] sm:$0xff]
  %308 = vst [vmem:[%s305] sm:$0xff] %v307
  %s309 = scalar_lea.vmem %s4, 104
  %s310 = scalar_lea.vmem %s1, 104
  %v311 = vld [vmem:[%s310] sm:$0xff]
  %312 = vst [vmem:[%s309] sm:$0xff] %v311
  %s313 = scalar_lea.vmem %s4, 112
  %s314 = scalar_lea.vmem %s1, 112
  %v315 = vld [vmem:[%s314] sm:$0xff]
  %316 = vst [vmem:[%s313] sm:$0xff] %v315
  %s317 = scalar_lea.vmem %s4, 120
  %s318 = scalar_lea.vmem %s1, 120
  %v319 = vld [vmem:[%s318] sm:$0xff]
  %320 = vst [vmem:[%s317] sm:$0xff] %v319
  %s321 = scalar_lea.vmem %s4, 128
  %s322 = scalar_lea.vmem %s1, 128
  %v323 = vld [vmem:[%s322] sm:$0xff]
  %324 = vst [vmem:[%s321] sm:$0xff] %v323
  %s325 = scalar_lea.vmem %s4, 136
  %s326 = scalar_lea.vmem %s1, 136
  %v327 = vld [vmem:[%s326] sm:$0xff]
  %328 = vst [vmem:[%s325] sm:$0xff] %v327
  %s329 = scalar_lea.vmem %s4, 144
  %s330 = scalar_lea.vmem %s1, 144
  %v331 = vld [vmem:[%s330] sm:$0xff]
  %332 = vst [vmem:[%s329] sm:$0xff] %v331
  %s333 = scalar_lea.vmem %s4, 152
  %s334 = scalar_lea.vmem %s1, 152
  %v335 = vld [vmem:[%s334] sm:$0xff]
  %336 = vst [vmem:[%s333] sm:$0xff] %v335
  %s337 = scalar_lea.vmem %s4, 160
  %s338 = scalar_lea.vmem %s1, 160
  %v339 = vld [vmem:[%s338] sm:$0xff]
  %340 = vst [vmem:[%s337] sm:$0xff] %v339
  %s341 = scalar_lea.vmem %s4, 168
  %s342 = scalar_lea.vmem %s1, 168
  %v343 = vld [vmem:[%s342] sm:$0xff]
  %344 = vst [vmem:[%s341] sm:$0xff] %v343
  %s345 = scalar_lea.vmem %s4, 176
  %s346 = scalar_lea.vmem %s1, 176
  %v347 = vld [vmem:[%s346] sm:$0xff]
  %348 = vst [vmem:[%s345] sm:$0xff] %v347
  %s349 = scalar_lea.vmem %s4, 184
  %s350 = scalar_lea.vmem %s1, 184
  %v351 = vld [vmem:[%s350] sm:$0xff]
  %352 = vst [vmem:[%s349] sm:$0xff] %v351
  %s353 = scalar_lea.vmem %s4, 192
  %s354 = scalar_lea.vmem %s1, 192
  %v355 = vld [vmem:[%s354] sm:$0xff]
  %356 = vst [vmem:[%s353] sm:$0xff] %v355
  %s357 = scalar_lea.vmem %s4, 200
  %s358 = scalar_lea.vmem %s1, 200
  %v359 = vld [vmem:[%s358] sm:$0xff]
  %360 = vst [vmem:[%s357] sm:$0xff] %v359
  %s361 = scalar_lea.vmem %s4, 208
  %s362 = scalar_lea.vmem %s1, 208
  %v363 = vld [vmem:[%s362] sm:$0xff]
  %364 = vst [vmem:[%s361] sm:$0xff] %v363
  %s365 = scalar_lea.vmem %s4, 216
  %s366 = scalar_lea.vmem %s1, 216
  %v367 = vld [vmem:[%s366] sm:$0xff]
  %368 = vst [vmem:[%s365] sm:$0xff] %v367
  %s369 = scalar_lea.vmem %s4, 224
  %s370 = scalar_lea.vmem %s1, 224
  %v371 = vld [vmem:[%s370] sm:$0xff]
  %372 = vst [vmem:[%s369] sm:$0xff] %v371
  %s373 = scalar_lea.vmem %s4, 232
  %s374 = scalar_lea.vmem %s1, 232
  %v375 = vld [vmem:[%s374] sm:$0xff]
  %376 = vst [vmem:[%s373] sm:$0xff] %v375
  %s377 = scalar_lea.vmem %s4, 240
  %s378 = scalar_lea.vmem %s1, 240
  %v379 = vld [vmem:[%s378] sm:$0xff]
  %380 = vst [vmem:[%s377] sm:$0xff] %v379
  %s381 = scalar_lea.vmem %s4, 248
  %s382 = scalar_lea.vmem %s1, 248
  %v383 = vld [vmem:[%s382] sm:$0xff]
  %384 = vst [vmem:[%s381] sm:$0xff] %v383
  %s385 = scalar_lea.vmem %s4, 256
  %s386 = scalar_lea.vmem %s1, 256
  %v387 = vld [vmem:[%s386] sm:$0xff]
  %388 = vst [vmem:[%s385] sm:$0xff] %v387
  %s389 = scalar_lea.vmem %s4, 264
  %s390 = scalar_lea.vmem %s1, 264
  %v391 = vld [vmem:[%s390] sm:$0xff]
  %392 = vst [vmem:[%s389] sm:$0xff] %v391
  %s393 = scalar_lea.vmem %s4, 272
  %s394 = scalar_lea.vmem %s1, 272
  %v395 = vld [vmem:[%s394] sm:$0xff]
  %396 = vst [vmem:[%s393] sm:$0xff] %v395
  %s397 = scalar_lea.vmem %s4, 280
  %s398 = scalar_lea.vmem %s1, 280
  %v399 = vld [vmem:[%s398] sm:$0xff]
  %400 = vst [vmem:[%s397] sm:$0xff] %v399
  %s401 = scalar_lea.vmem %s4, 288
  %s402 = scalar_lea.vmem %s1, 288
  %v403 = vld [vmem:[%s402] sm:$0xff]
  %404 = vst [vmem:[%s401] sm:$0xff] %v403
  %s405 = scalar_lea.vmem %s4, 296
  %s406 = scalar_lea.vmem %s1, 296
  %v407 = vld [vmem:[%s406] sm:$0xff]
  %408 = vst [vmem:[%s405] sm:$0xff] %v407
  %s409 = scalar_lea.vmem %s4, 304
  %s410 = scalar_lea.vmem %s1, 304
  %v411 = vld [vmem:[%s410] sm:$0xff]
  %412 = vst [vmem:[%s409] sm:$0xff] %v411
  %s413 = scalar_lea.vmem %s4, 312
  %s414 = scalar_lea.vmem %s1, 312
  %v415 = vld [vmem:[%s414] sm:$0xff]
  %416 = vst [vmem:[%s413] sm:$0xff] %v415
  %s417 = scalar_lea.vmem %s4, 320
  %s418 = scalar_lea.vmem %s1, 320
  %v419 = vld [vmem:[%s418] sm:$0xff]
  %420 = vst [vmem:[%s417] sm:$0xff] %v419
  %s421 = scalar_lea.vmem %s4, 328
  %s422 = scalar_lea.vmem %s1, 328
  %v423 = vld [vmem:[%s422] sm:$0xff]
  %424 = vst [vmem:[%s421] sm:$0xff] %v423
  %s425 = scalar_lea.vmem %s4, 336
  %s426 = scalar_lea.vmem %s1, 336
  %v427 = vld [vmem:[%s426] sm:$0xff]
  %428 = vst [vmem:[%s425] sm:$0xff] %v427
  %s429 = scalar_lea.vmem %s4, 344
  %s430 = scalar_lea.vmem %s1, 344
  %v431 = vld [vmem:[%s430] sm:$0xff]
  %432 = vst [vmem:[%s429] sm:$0xff] %v431
  %s433 = scalar_lea.vmem %s4, 352
  %s434 = scalar_lea.vmem %s1, 352
  %v435 = vld [vmem:[%s434] sm:$0xff]
  %436 = vst [vmem:[%s433] sm:$0xff] %v435
  %s437 = scalar_lea.vmem %s4, 360
  %s438 = scalar_lea.vmem %s1, 360
  %v439 = vld [vmem:[%s438] sm:$0xff]
  %440 = vst [vmem:[%s437] sm:$0xff] %v439
  %s441 = scalar_lea.vmem %s4, 368
  %s442 = scalar_lea.vmem %s1, 368
  %v443 = vld [vmem:[%s442] sm:$0xff]
  %444 = vst [vmem:[%s441] sm:$0xff] %v443
  %s445 = scalar_lea.vmem %s4, 376
  %s446 = scalar_lea.vmem %s1, 376
  %v447 = vld [vmem:[%s446] sm:$0xff]
  %448 = vst [vmem:[%s445] sm:$0xff] %v447
  %s449 = scalar_lea.vmem %s4, 384
  %s450 = scalar_lea.vmem %s1, 384
  %v451 = vld [vmem:[%s450] sm:$0xff]
  %452 = vst [vmem:[%s449] sm:$0xff] %v451
  %s453 = scalar_lea.vmem %s4, 392
  %s454 = scalar_lea.vmem %s1, 392
  %v455 = vld [vmem:[%s454] sm:$0xff]
  %456 = vst [vmem:[%s453] sm:$0xff] %v455
  %s457 = scalar_lea.vmem %s4, 400
  %s458 = scalar_lea.vmem %s1, 400
  %v459 = vld [vmem:[%s458] sm:$0xff]
  %460 = vst [vmem:[%s457] sm:$0xff] %v459
  %s461 = scalar_lea.vmem %s4, 408
  %s462 = scalar_lea.vmem %s1, 408
  %v463 = vld [vmem:[%s462] sm:$0xff]
  %464 = vst [vmem:[%s461] sm:$0xff] %v463
  %s465 = scalar_lea.vmem %s4, 416
  %s466 = scalar_lea.vmem %s1, 416
  %v467 = vld [vmem:[%s466] sm:$0xff]
  %468 = vst [vmem:[%s465] sm:$0xff] %v467
  %s469 = scalar_lea.vmem %s4, 424
  %s470 = scalar_lea.vmem %s1, 424
  %v471 = vld [vmem:[%s470] sm:$0xff]
  %472 = vst [vmem:[%s469] sm:$0xff] %v471
  %s473 = scalar_lea.vmem %s4, 432
  %s474 = scalar_lea.vmem %s1, 432
  %v475 = vld [vmem:[%s474] sm:$0xff]
  %476 = vst [vmem:[%s473] sm:$0xff] %v475
  %s477 = scalar_lea.vmem %s4, 440
  %s478 = scalar_lea.vmem %s1, 440
  %v479 = vld [vmem:[%s478] sm:$0xff]
  %480 = vst [vmem:[%s477] sm:$0xff] %v479
  %s481 = scalar_lea.vmem %s4, 448
  %s482 = scalar_lea.vmem %s1, 448
  %v483 = vld [vmem:[%s482] sm:$0xff]
  %484 = vst [vmem:[%s481] sm:$0xff] %v483
  %s485 = scalar_lea.vmem %s4, 456
  %s486 = scalar_lea.vmem %s1, 456
  %v487 = vld [vmem:[%s486] sm:$0xff]
  %488 = vst [vmem:[%s485] sm:$0xff] %v487
  %s489 = scalar_lea.vmem %s4, 464
  %s490 = scalar_lea.vmem %s1, 464
  %v491 = vld [vmem:[%s490] sm:$0xff]
  %492 = vst [vmem:[%s489] sm:$0xff] %v491
  %s493 = scalar_lea.vmem %s4, 472
  %s494 = scalar_lea.vmem %s1, 472
  %v495 = vld [vmem:[%s494] sm:$0xff]
  %496 = vst [vmem:[%s493] sm:$0xff] %v495
  %s497 = scalar_lea.vmem %s4, 480
  %s498 = scalar_lea.vmem %s1, 480
  %v499 = vld [vmem:[%s498] sm:$0xff]
  %500 = vst [vmem:[%s497] sm:$0xff] %v499
  %s501 = scalar_lea.vmem %s4, 488
  %s502 = scalar_lea.vmem %s1, 488
  %v503 = vld [vmem:[%s502] sm:$0xff]
  %504 = vst [vmem:[%s501] sm:$0xff] %v503
  %s505 = scalar_lea.vmem %s4, 496
  %s506 = scalar_lea.vmem %s1, 496
  %v507 = vld [vmem:[%s506] sm:$0xff]
  %508 = vst [vmem:[%s505] sm:$0xff] %v507
  %s509 = scalar_lea.vmem %s4, 504
  %s510 = scalar_lea.vmem %s1, 504
  %v511 = vld [vmem:[%s510] sm:$0xff]
  %512 = vst [vmem:[%s509] sm:$0xff] %v511

</llo_original>
